<compile_context>
chip_gen: v7x
topology: tpu7x:2x2x1
jax: 0.10.0
libtpu: 0.0.40
codegen_flags: <defaults>
</compile_context>

<pallas_src>
import jax
import jax.numpy as jnp
from jax.experimental import pallas as pl
from jax.experimental.pallas import tpu as pltpu

BN_EPS = 1e-5
LANE = 128
ROWS_TARGET = 2048          # target flattened conv rows per grid step


def _round_up(x, m):
    return (x + m - 1) // m * m


def _vmem_limit_bytes():
    cap = 128 * 1024 * 1024
    try:
        cap = int(getattr(pltpu.get_tpu_info(), "vmem_capacity_bytes", cap))
    except Exception:
        pass
    # ~half of physical VMEM: 48 MiB on v5e/v6e (128 MiB), 32 MiB on v7x (64 MiB).
    return int(min(48 * 1024 * 1024, cap // 2))


def conv_block_forward(x_nchw, weight, bias=None):
    """x_nchw: (N, Cin, H, W) f32; weight: (Cout, Cin, 3, 3) f32.

    `bias` is unused: under training-mode BatchNorm (gamma=1, beta=0) a
    per-channel conv bias cancels exactly against the batch-mean subtraction.
    """
    del bias
    N, Cin, H, W = x_nchw.shape
    Cout = weight.shape[0]
    Cin_p = _round_up(Cin, LANE)
    Cout_p = _round_up(Cout, LANE)

    Wp_a = _round_up(W + 2, 8)                      # padded width, sublane aligned
    TH = max(1, min(H, ROWS_TARGET // Wp_a))        # output rows per tile
    n_t = pl.cdiv(H, TH)
    H_pad = n_t * TH
    TM = TH * Wp_a                                  # flattened conv rows per tile

    fold_taps = _round_up(9 * Cin, LANE) <= Cin_p   # Cin <= 14 -> fold path

    # ---- wrapper-side layout prep (single streaming pass over the input) ----
    x = jnp.transpose(x_nchw, (0, 2, 3, 1)).astype(jnp.bfloat16)   # NHWC bf16

    if fold_taps:
        # Fold the 9 taps into the contraction dim: K = round_up(9*Cin, 128).
        Kp = _round_up(9 * Cin, LANE)
        xp = jnp.pad(x, ((0, 0), (1, 1 + H_pad - H), (1, Wp_a - W - 1), (0, 0)))
        xflat = xp.reshape(N, (H_pad + 2) * Wp_a, Cin)
        xflat = jnp.pad(xflat, ((0, 0), (0, 8), (0, 0)))
        taps = [xflat[:, dy * Wp_a + dx: dy * Wp_a + dx + H_pad * Wp_a, :]
                for dy in range(3) for dx in range(3)]
        xcat = jnp.concatenate(taps, axis=-1)                      # (N, H_pad*Wp_a, 9*Cin)
        xcat = jnp.pad(xcat, ((0, 0), (0, 0), (0, Kp - 9 * Cin)))
        xt = xcat.reshape(N, n_t, TM, Kp)
        rows_in = TM
        offsets = (0,)
        w = jnp.transpose(weight, (2, 3, 1, 0)).reshape(9 * Cin, Cout)
        w = jnp.pad(w, ((0, Kp - 9 * Cin), (0, Cout_p - Cout)))
        w = w.reshape(1, Kp, Cout_p).astype(jnp.bfloat16)
    else:
        # 9 shifted MXU matmuls over the padded flattened image.
        Kp = Cin_p
        xp = jnp.pad(x, ((0, 0), (1, 1 + H_pad - H), (1, Wp_a - W - 1),
                         (0, Cin_p - Cin)))
        xflat = xp.reshape(N, (H_pad + 2) * Wp_a, Cin_p)
        xflat = jnp.pad(xflat, ((0, 0), (0, 8), (0, 0)))
        rows_in = TM + 2 * Wp_a + 8                 # halo rows, multiple of 8
        xt = jnp.stack([xflat[:, t * TM: t * TM + rows_in, :]
                        for t in range(n_t)], axis=1)   # (N, n_t, rows_in, Cin_p)
        offsets = tuple(dy * Wp_a + dx for dy in range(3) for dx in range(3))
        w = jnp.transpose(weight, (2, 3, 1, 0)).reshape(9, Cin, Cout)
        w = jnp.pad(w, ((0, 0), (0, Cin_p - Cin), (0, Cout_p - Cout)))
        w = w.astype(jnp.bfloat16)

    n_taps = len(offsets)

    # Per-tile valid-position mask (wrap-around columns and padded rows).
    pos = jnp.arange(n_t * TM, dtype=jnp.int32)
    valid = jnp.logical_and(pos % Wp_a < W, pos // Wp_a < H)
    mask = valid.astype(jnp.float32).reshape(n_t, TM, 1)

    vmem_limit = _vmem_limit_bytes()

    # ---- pass 1: conv (MXU, f32 accumulate) + per-tile sum / sum-of-squares ----
    def conv_stats_kernel(x_ref, w_ref, m_ref, conv_ref, s_ref, ss_ref, acc_ref):
        acc_ref[...] = jnp.dot(x_ref[0, 0, pl.ds(offsets[0], TM), :], w_ref[0],
                               preferred_element_type=jnp.float32)
        for k in range(1, n_taps):
            acc_ref[...] += jnp.dot(x_ref[0, 0, pl.ds(offsets[k], TM), :],
                                    w_ref[k],
                                    preferred_element_type=jnp.float32)
        conv = acc_ref[...] * m_ref[0]              # zero invalid rows/cols (f32)
        conv_ref[0, 0] = conv.astype(conv_ref.dtype)       # bf16 intermediate
        s_ref[0, 0] = jnp.sum(conv, axis=0, keepdims=True)
        ss_ref[0, 0] = jnp.sum(conv * conv, axis=0, keepdims=True)

    flops = 2 * N * n_t * TM * Kp * Cout_p * n_taps
    bytes_accessed = (xt.size * 2 + w.size * 2 + mask.size * 4
                      + N * n_t * TM * Cout_p * 2 + 2 * N * n_t * Cout_p * 4)

    conv_out, s_out, ss_out = pl.pallas_call(
        conv_stats_kernel,
        grid=(N, n_t),
        in_specs=[
            pl.BlockSpec((1, 1, rows_in, Kp), lambda n, t: (n, t, 0, 0)),
            pl.BlockSpec((n_taps, Kp, Cout_p), lambda n, t: (0, 0, 0)),
            pl.BlockSpec((1, TM, 1), lambda n, t: (t, 0, 0)),
        ],
        out_specs=[
            pl.BlockSpec((1, 1, TM, Cout_p), lambda n, t: (n, t, 0, 0)),
            pl.BlockSpec((1, 1, 1, Cout_p), lambda n, t: (n, t, 0, 0)),
            pl.BlockSpec((1, 1, 1, Cout_p), lambda n, t: (n, t, 0, 0)),
        ],
        out_shape=[
            jax.ShapeDtypeStruct((N, n_t, TM, Cout_p), jnp.bfloat16),
            jax.ShapeDtypeStruct((N, n_t, 1, Cout_p), jnp.float32),
            jax.ShapeDtypeStruct((N, n_t, 1, Cout_p), jnp.float32),
        ],
        scratch_shapes=[pltpu.VMEM((TM, Cout_p), jnp.float32)],
        compiler_params=pltpu.CompilerParams(
            dimension_semantics=("parallel", "parallel"),
            vmem_limit_bytes=vmem_limit),
        cost_estimate=pl.CostEstimate(flops=flops, transcendentals=0,
                                      bytes_accessed=bytes_accessed),
    )(xt, w, mask)

    # ---- finalize batch statistics (tiny (N, n_t, Cout_p) reduce in XLA) ----
    count = float(N * H * W)
    tot_s = jnp.sum(s_out, axis=(0, 1))             # (1, Cout_p)
    tot_ss = jnp.sum(ss_out, axis=(0, 1))
    mean = tot_s / count
    var = jnp.maximum(tot_ss / count - mean * mean, 0.0)   # biased variance
    inv_std = jax.lax.rsqrt(var + BN_EPS)
    scale = inv_std                                  # gamma = 1
    shift = -mean * inv_std                          # beta  = 0
    # Padded Cout lanes have zero data -> scale ~ 1/sqrt(eps), shift = 0:
    # they stay exactly 0 after the affine+ReLU and are sliced away below.

    # ---- pass 2: streaming normalize + ReLU (lane-dense, bf16 in/out) ----
    def bn_relu_kernel(c_ref, a_ref, b_ref, o_ref):
        y = c_ref[0, 0].astype(jnp.float32) * a_ref[...] + b_ref[...]
        o_ref[0, 0] = jnp.maximum(y, 0.0).astype(o_ref.dtype)

    y = pl.pallas_call(
        bn_relu_kernel,
        grid=(N, n_t),
        in_specs=[
            pl.BlockSpec((1, 1, TM, Cout_p), lambda n, t: (n, t, 0, 0)),
            pl.BlockSpec((1, Cout_p), lambda n, t: (0, 0)),
            pl.BlockSpec((1, Cout_p), lambda n, t: (0, 0)),
        ],
        out_specs=pl.BlockSpec((1, 1, TM, Cout_p), lambda n, t: (n, t, 0, 0)),
        out_shape=jax.ShapeDtypeStruct((N, n_t, TM, Cout_p), jnp.bfloat16),
        compiler_params=pltpu.CompilerParams(
            dimension_semantics=("parallel", "parallel"),
            vmem_limit_bytes=vmem_limit),
    )(conv_out, scale, shift)

    # ---- epilogue: drop padding, NHWC -> NCHW, cast to f32 (module dtype) ----
    # The reshape is contiguous (free); slice+transpose+cast fuse in XLA and
    # read only the valid H*W*Cout region of the bf16 result.
    y = y.reshape(N, H_pad, Wp_a, Cout_p)[:, :H, :W, :Cout]
    return jnp.transpose(y, (0, 3, 1, 2)).astype(jnp.float32)


def init_params(key, in_channels, out_channels):
    kw, kb = jax.random.split(key)
    # kaiming_normal_(mode='fan_out', nonlinearity='relu')
    fan_out = out_channels * 9
    std = (2.0 / fan_out) ** 0.5
    weight = std * jax.random.normal(kw, (out_channels, in_channels, 3, 3),
                                     dtype=jnp.float32)
    # Conv2d default bias init (mathematically cancelled by training-mode BN).
    fan_in = in_channels * 9
    bound = 1.0 / (fan_in ** 0.5)
    bias = jax.random.uniform(kb, (out_channels,), dtype=jnp.float32,
                              minval=-bound, maxval=bound)
    return weight, bias


def reference_forward(x_nchw, weight):
    # Same bf16 operand quantization as the kernel path; conv bias omitted
    # because training-mode BN (gamma=1, beta=0) cancels it exactly.
    xb = x_nchw.astype(jnp.bfloat16).astype(jnp.float32)
    wb = weight.astype(jnp.bfloat16).astype(jnp.float32)
    conv = jax.lax.conv_general_dilated(
        xb, wb, window_strides=(1, 1), padding=((1, 1), (1, 1)),
        dimension_numbers=("NCHW", "OIHW", "NCHW"))
    mean = jnp.mean(conv, axis=(0, 2, 3), keepdims=True)
    var = jnp.var(conv, axis=(0, 2, 3), keepdims=True)
    return jnp.maximum((conv - mean) * jax.lax.rsqrt(var + BN_EPS), 0.0)


if __name__ == "__main__":
    key = jax.random.PRNGKey(0)
    k1, k2, k3, k4 = jax.random.split(key, 4)
    fwd = jax.jit(conv_block_forward)

    # Config 1: small-Cin fold path (input-layer shape class).
    N, Cin, H, W, Cout = 2, 4, 16, 16, 8
    x = jax.random.normal(k1, (N, Cin, H, W), dtype=jnp.float32)
    weight, bias = init_params(k2, Cin, Cout)
    out = fwd(x, weight, bias)
    jax.block_until_ready(out)
    assert out.shape == (N, Cout, H, W) and out.dtype == jnp.float32
    ref = reference_forward(x, weight)
    err = float(jnp.max(jnp.abs(out - ref)))
    assert bool(jnp.allclose(out, ref, rtol=2e-2, atol=2e-2)), err

    # Config 2: 9-shift path (residual-block shape class, Cin > 14).
    N2, Cin2, H2, W2, Cout2 = 2, 16, 8, 8, 8
    x2 = jax.random.normal(k3, (N2, Cin2, H2, W2), dtype=jnp.float32)
    weight2, bias2 = init_params(k4, Cin2, Cout2)
    out2 = fwd(x2, weight2, bias2)
    jax.block_until_ready(out2)
    assert out2.shape == (N2, Cout2, H2, W2)
    ref2 = reference_forward(x2, weight2)
    err2 = float(jnp.max(jnp.abs(out2 - ref2)))
    assert bool(jnp.allclose(out2, ref2, rtol=2e-2, atol=2e-2)), err2

    print("KERNEL_OK")
</pallas_src>

<mosaic_0001>
module attributes {stable_mosaic.version = 11 : i64} {
  func.func @conv_stats_kernel(%arg0: i32, %arg1: i32, %arg2: memref<1x1x384x128xbf16, #tpu.memory_space<vmem>>, %arg3: memref<1x128x128xbf16, #tpu.memory_space<vmem>>, %arg4: memref<1x384x1xf32, #tpu.memory_space<vmem>>, %arg5: memref<1x1x384x128xbf16, #tpu.memory_space<vmem>>, %arg6: memref<1x1x1x128xf32, #tpu.memory_space<vmem>>, %arg7: memref<1x1x1x128xf32, #tpu.memory_space<vmem>>, %arg8: memref<384x128xf32, #tpu.memory_space<vmem>>) attributes {dimension_semantics = [#tpu.dimension_semantics<parallel>, #tpu.dimension_semantics<parallel>], iteration_bounds = array<i64: 2, 1>, scalar_prefetch = 0 : i64, scratch_operands = 1 : i64, tpu.core_type = #tpu.core_type<tc>, window_params = [{transform_indices = @transform_0, window_bounds = array<i64: 1, 1, 384, 128>}, {pipeline_mode = #tpu.pipeline_mode<synchronous>, transform_indices = @transform_1, window_bounds = array<i64: 1, 128, 128>}, {transform_indices = @transform_2, window_bounds = array<i64: 1, 384, 1>}, {transform_indices = @transform_3, window_bounds = array<i64: 1, 1, 384, 128>}, {transform_indices = @transform_4, window_bounds = array<i64: 1, 1, 1, 128>}, {transform_indices = @transform_5, window_bounds = array<i64: 1, 1, 1, 128>}]} {
    %c0 = arith.constant 0 : index
    %c0_0 = arith.constant 0 : index
    %c0_1 = arith.constant 0 : index
    %c0_2 = arith.constant 0 : index
    %0 = vector.load %arg2[%c0, %c0_0, %c0_1, %c0_2] : memref<1x1x384x128xbf16, #tpu.memory_space<vmem>>, vector<1x1x384x128xbf16>
    %1 = vector.shape_cast %0 : vector<1x1x384x128xbf16> to vector<384x128xbf16>
    %c0_3 = arith.constant 0 : index
    %c0_4 = arith.constant 0 : index
    %c0_5 = arith.constant 0 : index
    %2 = vector.load %arg3[%c0_3, %c0_4, %c0_5] : memref<1x128x128xbf16, #tpu.memory_space<vmem>>, vector<1x128x128xbf16>
    %3 = vector.shape_cast %2 : vector<1x128x128xbf16> to vector<128x128xbf16>
    %cst = arith.constant dense<0.000000e+00> : vector<384x128xf32>
    %4 = tpu.matmul %1, %3, %cst {dimension_numbers = #tpu.dot_dimension_numbers<[1], [0], [0], [1], [0, 0, 1, 1], [], []>} : vector<384x128xbf16>, vector<128x128xbf16>, vector<384x128xf32> -> vector<384x128xf32>
    %c0_6 = arith.constant 0 : index
    %c0_7 = arith.constant 0 : index
    %5 = vector.load %arg8[%c0_6, %c0_7] : memref<384x128xf32, #tpu.memory_space<vmem>>, vector<384x128xf32>
    tpu.vector_store %arg8[%c0_6, %c0_7], %4 {strides = array<i32>} : memref<384x128xf32, #tpu.memory_space<vmem>>, vector<384x128xf32>,
    %c0_8 = arith.constant 0 : index
    %c0_9 = arith.constant 0 : index
    %6 = vector.load %arg8[%c0_8, %c0_9] : memref<384x128xf32, #tpu.memory_space<vmem>>, vector<384x128xf32>
    %c0_10 = arith.constant 0 : index
    %c0_11 = arith.constant 0 : index
    %c0_12 = arith.constant 0 : index
    %7 = vector.load %arg4[%c0_10, %c0_11, %c0_12] : memref<1x384x1xf32, #tpu.memory_space<vmem>>, vector<1x384x1xf32>
    %8 = vector.shape_cast %7 : vector<1x384x1xf32> to vector<384x1xf32>
    %9 = vector.broadcast %8 : vector<384x1xf32> to vector<384x128xf32>
    %10 = arith.mulf %6, %9 : vector<384x128xf32>
    %11 = arith.truncf %10 : vector<384x128xf32> to vector<384x128xbf16>
    %c0_13 = arith.constant 0 : index
    %c0_14 = arith.constant 0 : index
    %c0_15 = arith.constant 0 : index
    %c0_16 = arith.constant 0 : index
    %12 = vector.load %arg5[%c0_13, %c0_14, %c0_15, %c0_16] : memref<1x1x384x128xbf16, #tpu.memory_space<vmem>>, vector<1x1x384x128xbf16>
    %13 = vector.shape_cast %12 : vector<1x1x384x128xbf16> to vector<384x128xbf16>
    %14 = vector.shape_cast %11 : vector<384x128xbf16> to vector<1x1x384x128xbf16>
    tpu.vector_store %arg5[%c0_13, %c0_14, %c0_15, %c0_16], %14 {strides = array<i32>} : memref<1x1x384x128xbf16, #tpu.memory_space<vmem>>, vector<1x1x384x128xbf16>,
    %cst_17 = arith.constant dense<0.000000e+00> : vector<128xf32>
    %15 = vector.multi_reduction <add>, %10, %cst_17 [0] : vector<384x128xf32> to vector<128xf32>
    %16 = vector.shape_cast %15 : vector<128xf32> to vector<1x128xf32>
    %c0_18 = arith.constant 0 : index
    %c0_19 = arith.constant 0 : index
    %c0_20 = arith.constant 0 : index
    %c0_21 = arith.constant 0 : index
    %17 = vector.load %arg6[%c0_18, %c0_19, %c0_20, %c0_21] : memref<1x1x1x128xf32, #tpu.memory_space<vmem>>, vector<1x1x1x128xf32>
    %18 = vector.shape_cast %17 : vector<1x1x1x128xf32> to vector<1x128xf32>
    %19 = vector.shape_cast %16 : vector<1x128xf32> to vector<1x1x1x128xf32>
    tpu.vector_store %arg6[%c0_18, %c0_19, %c0_20, %c0_21], %19 {strides = array<i32>} : memref<1x1x1x128xf32, #tpu.memory_space<vmem>>, vector<1x1x1x128xf32>,
    %20 = arith.mulf %10, %10 : vector<384x128xf32>
    %cst_22 = arith.constant dense<0.000000e+00> : vector<128xf32>
    %21 = vector.multi_reduction <add>, %20, %cst_22 [0] : vector<384x128xf32> to vector<128xf32>
    %22 = vector.shape_cast %21 : vector<128xf32> to vector<1x128xf32>
    %c0_23 = arith.constant 0 : index
    %c0_24 = arith.constant 0 : index
    %c0_25 = arith.constant 0 : index
    %c0_26 = arith.constant 0 : index
    %23 = vector.load %arg7[%c0_23, %c0_24, %c0_25, %c0_26] : memref<1x1x1x128xf32, #tpu.memory_space<vmem>>, vector<1x1x1x128xf32>
    %24 = vector.shape_cast %23 : vector<1x1x1x128xf32> to vector<1x128xf32>
    %25 = vector.shape_cast %22 : vector<1x128xf32> to vector<1x1x1x128xf32>
    tpu.vector_store %arg7[%c0_23, %c0_24, %c0_25, %c0_26], %25 {strides = array<i32>} : memref<1x1x1x128xf32, #tpu.memory_space<vmem>>, vector<1x1x1x128xf32>,
    return
  }
  func.func @transform_0(%arg0: i32, %arg1: i32) -> (i32, i32, i32, i32) {
    %c0_i32 = arith.constant 0 : i32
    %c0_i32_0 = arith.constant 0 : i32
    %c0_i32_1 = arith.constant 0 : i32
    return %arg0, %arg1, %c0_i32, %c0_i32_0 : i32, i32, i32, i32
  }
  func.func @transform_1(%arg0: i32, %arg1: i32) -> (i32, i32, i32) {
    %c0_i32 = arith.constant 0 : i32
    %c0_i32_0 = arith.constant 0 : i32
    %c0_i32_1 = arith.constant 0 : i32
    %c0_i32_2 = arith.constant 0 : i32
    return %c0_i32, %c0_i32_0, %c0_i32_1 : i32, i32, i32
  }
  func.func @transform_2(%arg0: i32, %arg1: i32) -> (i32, i32, i32) {
    %c0_i32 = arith.constant 0 : i32
    %c0_i32_0 = arith.constant 0 : i32
    %c0_i32_1 = arith.constant 0 : i32
    return %arg1, %c0_i32, %c0_i32_0 : i32, i32, i32
  }
  func.func @transform_3(%arg0: i32, %arg1: i32) -> (i32, i32, i32, i32) {
    %c0_i32 = arith.constant 0 : i32
    %c0_i32_0 = arith.constant 0 : i32
    %c0_i32_1 = arith.constant 0 : i32
    return %arg0, %arg1, %c0_i32, %c0_i32_0 : i32, i32, i32, i32
  }
  func.func @transform_4(%arg0: i32, %arg1: i32) -> (i32, i32, i32, i32) {
    %c0_i32 = arith.constant 0 : i32
    %c0_i32_0 = arith.constant 0 : i32
    %c0_i32_1 = arith.constant 0 : i32
    return %arg0, %arg1, %c0_i32, %c0_i32_0 : i32, i32, i32, i32
  }
  func.func @transform_5(%arg0: i32, %arg1: i32) -> (i32, i32, i32, i32) {
    %c0_i32 = arith.constant 0 : i32
    %c0_i32_0 = arith.constant 0 : i32
    %c0_i32_1 = arith.constant 0 : i32
    return %arg0, %arg1, %c0_i32, %c0_i32_0 : i32, i32, i32, i32
  }
}

module attributes {stable_mosaic.version = 11 : i64} {
  func.func @bn_relu_kernel(%arg0: i32, %arg1: i32, %arg2: memref<1x1x384x128xbf16, #tpu.memory_space<vmem>>, %arg3: memref<1x128xf32, #tpu.memory_space<vmem>>, %arg4: memref<1x128xf32, #tpu.memory_space<vmem>>, %arg5: memref<1x1x384x128xbf16, #tpu.memory_space<vmem>>) attributes {dimension_semantics = [#tpu.dimension_semantics<parallel>, #tpu.dimension_semantics<parallel>], iteration_bounds = array<i64: 2, 1>, scalar_prefetch = 0 : i64, scratch_operands = 0 : i64, tpu.core_type = #tpu.core_type<tc>, window_params = [{transform_indices = @transform_0, window_bounds = array<i64: 1, 1, 384, 128>}, {pipeline_mode = #tpu.pipeline_mode<synchronous>, transform_indices = @transform_1, window_bounds = array<i64: 1, 128>}, {pipeline_mode = #tpu.pipeline_mode<synchronous>, transform_indices = @transform_2, window_bounds = array<i64: 1, 128>}, {transform_indices = @transform_3, window_bounds = array<i64: 1, 1, 384, 128>}]} {
    %c0 = arith.constant 0 : index
    %c0_0 = arith.constant 0 : index
    %c0_1 = arith.constant 0 : index
    %c0_2 = arith.constant 0 : index
    %0 = vector.load %arg2[%c0, %c0_0, %c0_1, %c0_2] : memref<1x1x384x128xbf16, #tpu.memory_space<vmem>>, vector<1x1x384x128xbf16>
    %1 = vector.shape_cast %0 : vector<1x1x384x128xbf16> to vector<384x128xbf16>
    %2 = arith.extf %1 : vector<384x128xbf16> to vector<384x128xf32>
    %c0_3 = arith.constant 0 : index
    %c0_4 = arith.constant 0 : index
    %3 = vector.load %arg3[%c0_3, %c0_4] : memref<1x128xf32, #tpu.memory_space<vmem>>, vector<1x128xf32>
    %4 = vector.broadcast %3 : vector<1x128xf32> to vector<384x128xf32>
    %5 = arith.mulf %2, %4 : vector<384x128xf32>
    %c0_5 = arith.constant 0 : index
    %c0_6 = arith.constant 0 : index
    %6 = vector.load %arg4[%c0_5, %c0_6] : memref<1x128xf32, #tpu.memory_space<vmem>>, vector<1x128xf32>
    %7 = vector.broadcast %6 : vector<1x128xf32> to vector<384x128xf32>
    %8 = arith.addf %5, %7 : vector<384x128xf32>
    %cst = arith.constant 0.000000e+00 : f32
    %9 = vector.broadcast %cst : f32 to vector<384x128xf32>
    %10 = arith.maximumf %8, %9 : vector<384x128xf32>
    %11 = arith.truncf %10 : vector<384x128xf32> to vector<384x128xbf16>
    %c0_7 = arith.constant 0 : index
    %c0_8 = arith.constant 0 : index
    %c0_9 = arith.constant 0 : index
    %c0_10 = arith.constant 0 : index
    %12 = vector.load %arg5[%c0_7, %c0_8, %c0_9, %c0_10] : memref<1x1x384x128xbf16, #tpu.memory_space<vmem>>, vector<1x1x384x128xbf16>
    %13 = vector.shape_cast %12 : vector<1x1x384x128xbf16> to vector<384x128xbf16>
    %14 = vector.shape_cast %11 : vector<384x128xbf16> to vector<1x1x384x128xbf16>
    tpu.vector_store %arg5[%c0_7, %c0_8, %c0_9, %c0_10], %14 {strides = array<i32>} : memref<1x1x384x128xbf16, #tpu.memory_space<vmem>>, vector<1x1x384x128xbf16>,
    return
  }
  func.func @transform_0(%arg0: i32, %arg1: i32) -> (i32, i32, i32, i32) {
    %c0_i32 = arith.constant 0 : i32
    %c0_i32_0 = arith.constant 0 : i32
    %c0_i32_1 = arith.constant 0 : i32
    return %arg0, %arg1, %c0_i32, %c0_i32_0 : i32, i32, i32, i32
  }
  func.func @transform_1(%arg0: i32, %arg1: i32) -> (i32, i32) {
    %c0_i32 = arith.constant 0 : i32
    %c0_i32_0 = arith.constant 0 : i32
    %c0_i32_1 = arith.constant 0 : i32
    return %c0_i32, %c0_i32_0 : i32, i32
  }
  func.func @transform_2(%arg0: i32, %arg1: i32) -> (i32, i32) {
    %c0_i32 = arith.constant 0 : i32
    %c0_i32_0 = arith.constant 0 : i32
    %c0_i32_1 = arith.constant 0 : i32
    return %c0_i32, %c0_i32_0 : i32, i32
  }
  func.func @transform_3(%arg0: i32, %arg1: i32) -> (i32, i32, i32, i32) {
    %c0_i32 = arith.constant 0 : i32
    %c0_i32_0 = arith.constant 0 : i32
    %c0_i32_1 = arith.constant 0 : i32
    return %arg0, %arg1, %c0_i32, %c0_i32_0 : i32, i32, i32, i32
  }
}

</mosaic_0001>

<llo_original>
// kernel: conv_block_forward.3
$region0: #{conv_block_forward.3}
  #allocation0 [shape = 'u32[]', space=smem, size = 0x4, offset = 0x4, fixed_abs, tag = 'smem constant byte address 0x4 - core index']
  #allocation1 [shape = 'u32[144,128]{1,0:T(1,128)}', space=vmem, size = 0x12000, scoped, tag = 'internal scratch']
  %s0 = inlined_call_operand.vmem [shape: bf16[2,1,384,128], index: 0, kind: input, shape index: {}]
  %s1 = inlined_call_operand.vmem [shape: f32[1,128], index: 1, kind: input, shape index: {}]
  %s2 = inlined_call_operand.vmem [shape: f32[1,128], index: 2, kind: input, shape index: {}]
  %s3 = inlined_call_operand.vmem [shape: bf16[2,1,384,128], index: 3, kind: output, shape index: {}]
  %s4 = sld [smem:[#allocation0]]
  $region45: #{conv_block_forward.3} parent=0
    _
  %s6 = ssub.s32 1, %s4
  %s7 = scalar_select 0, %s6, %s4
  loop: start=0, step=1, limit=4
  $region2: #{conv_block_forward.3} parent=0 // loop_pre_header
    _
  $region3: #{conv_block_forward.3} parent=0 // loop_header
    %s9 = sphi 0, %s13
    %p10 = scmp.ge.s32.totalorder %s9, 4
    %s16 = sphi 0, %s28
    %s17 = sphi 0, %s24
    %s18 = sphi 0, %s16
    %s19 = sphi 0, %s17
    %s20 = sphi 0, %s18
    %s21 = sphi 0, %s19
    %s33 = sphi 0, %s35
    %s36 = sphi 0, %s33
    %s37 = sphi 0, %s36
    %s53 = sphi 0, %s37
    %s57 = sphi 0, %s57
    %s59 = sphi 0, %s57
    %s60 = sphi 0, %s59
    %s74 = sphi 0, %s60
    %s78 = sphi 0, %s78
    %s80 = sphi 0, %s78
    %s81 = sphi 0, %s80
    %s95 = sphi 0, %s81
    %s103 = sphi 0, %s105
    %s106 = sphi 0, %s103
    %s107 = sphi 0, %s106
    %s123 = sphi 0, %s107
  $region4: #{conv_block_forward.3} parent=0 // loop_header_branch
    %12 = sbr.rel (%p10) target = $region8
  $region5: #{conv_block_forward.3} parent=0 // loop_body
    %s14 = ssub.s32 %s9, 1
    %s15 = ssub.s32 %s9, 2
    %s22 = sadd.s32 1, %s17
    %p23 = scmp.ge.s32.totalorder %s22, 1
    %s24 = scalar_select %p23, 0, %s22
    %s25 = sadd.s32 1, %s16
    %s26 = scalar_select %p23, %s25, %s16
    %p27 = scmp.ge.s32.totalorder %s26, 2
    %s28 = scalar_select %p27, 0, %s26
    %s29 = ssub.s32 %s16, %s28
    %s30 = ssub.s32 %s17, %s24
    %s31 = sor.u32 %s29, %s30
    %p32 = scmp.eq.s32.totalorder %s31, 0
    %s34 = sadd.s32 %s33, 1
    %s35 = scalar_select %p32, %s33, %s34
    %p38 = pneg %p32
    %p39 = scmp.eq.s32.totalorder %s9, 1
    %p40 = por %p38, %p39
    %p41 = scmp.ne.s32.totalorder %s33, %s36
    %p42 = scmp.eq.s32.totalorder %s9, 0
    %p43 = por %p41, %p42
    %p44 = scmp.ne.s32.totalorder %s33, %s36
    %p45 = scmp.eq.s32.totalorder %s14, 1
    %p46 = por %p44, %p45
    %p47 = scmp.ne.s32.totalorder %s36, %s37
    %p48 = scmp.eq.s32.totalorder %s14, 0
    %p49 = por %p47, %p48
    %p50 = scmp.ne.s32.totalorder %s36, %s37
    %p51 = scmp.eq.s32.totalorder %s15, 1
    %p52 = por %p50, %p51
    %p54 = scmp.ne.s32.totalorder %s37, %s53
    %p55 = scmp.eq.s32.totalorder %s15, 0
    %p56 = por %p54, %p55
    %s58 = sadd.s32 %s57, 1
    %p61 = scmp.eq.s32.totalorder %s9, 1
    %p62 = scmp.ne.s32.totalorder %s57, %s59
    %p63 = scmp.eq.s32.totalorder %s9, 0
    %p64 = por %p62, %p63
    %p65 = scmp.ne.s32.totalorder %s57, %s59
    %p66 = scmp.eq.s32.totalorder %s14, 1
    %p67 = por %p65, %p66
    %p68 = scmp.ne.s32.totalorder %s59, %s60
    %p69 = scmp.eq.s32.totalorder %s14, 0
    %p70 = por %p68, %p69
    %p71 = scmp.ne.s32.totalorder %s59, %s60
    %p72 = scmp.eq.s32.totalorder %s15, 1
    %p73 = por %p71, %p72
    %p75 = scmp.ne.s32.totalorder %s60, %s74
    %p76 = scmp.eq.s32.totalorder %s15, 0
    %p77 = por %p75, %p76
    %s79 = sadd.s32 %s78, 1
    %p82 = scmp.eq.s32.totalorder %s9, 1
    %p83 = scmp.ne.s32.totalorder %s78, %s80
    %p84 = scmp.eq.s32.totalorder %s9, 0
    %p85 = por %p83, %p84
    %p86 = scmp.ne.s32.totalorder %s78, %s80
    %p87 = scmp.eq.s32.totalorder %s14, 1
    %p88 = por %p86, %p87
    %p89 = scmp.ne.s32.totalorder %s80, %s81
    %p90 = scmp.eq.s32.totalorder %s14, 0
    %p91 = por %p89, %p90
    %p92 = scmp.ne.s32.totalorder %s80, %s81
    %p93 = scmp.eq.s32.totalorder %s15, 1
    %p94 = por %p92, %p93
    %p96 = scmp.ne.s32.totalorder %s81, %s95
    %p97 = scmp.eq.s32.totalorder %s15, 0
    %p98 = por %p96, %p97
    %s99 = ssub.s32 %s16, %s28
    %s100 = ssub.s32 %s17, %s24
    %s101 = sor.u32 %s99, %s100
    %p102 = scmp.eq.s32.totalorder %s101, 0
    %s104 = sadd.s32 %s103, 1
    %s105 = scalar_select %p102, %s103, %s104
    %p108 = pneg %p102
    %p109 = scmp.eq.s32.totalorder %s9, 1
    %p110 = por %p108, %p109
    %p111 = scmp.ne.s32.totalorder %s103, %s106
    %p112 = scmp.eq.s32.totalorder %s9, 0
    %p113 = por %p111, %p112
    %p114 = scmp.ne.s32.totalorder %s103, %s106
    %p115 = scmp.eq.s32.totalorder %s14, 1
    %p116 = por %p114, %p115
    %p117 = scmp.ne.s32.totalorder %s106, %s107
    %p118 = scmp.eq.s32.totalorder %s14, 0
    %p119 = por %p117, %p118
    %p120 = scmp.ne.s32.totalorder %s106, %s107
    %p121 = scmp.eq.s32.totalorder %s15, 1
    %p122 = por %p120, %p121
    %p124 = scmp.ne.s32.totalorder %s107, %s123
    %p125 = scmp.eq.s32.totalorder %s15, 0
    %p126 = por %p124, %p125
    %p127 = scmp.le.s32.totalorder 1, %s9
    %p128 = scmp.lt.s32.totalorder %s9, 3
    %p129 = pnand %p127, %p128
    %p130 = pneg %p129
    // Predicated region
    $region9: #{conv_block_forward.3} parent=5 // pred_check
      _
    $region10: #{conv_block_forward.3} parent=5 // pred_check_branch
      %132 = sbr.rel (%p129) target = $region12
    $region11: #{conv_block_forward.3} parent=5 // pred_region
      %s133 = ssub.s32 %s9, 1
      // Predicated region
      $region13: #{conv_block_forward.3} parent=11 // pred_check
        %p134 = pneg %p70
      $region14: #{conv_block_forward.3} parent=11 // pred_check_branch
        %136 = sbr.rel (%p134) target = $region16
      $region15: #{conv_block_forward.3} parent=11 // pred_region
        _
      $region16: #{conv_block_forward.3} parent=11 // pred_fallthru
        _
      // Predicated region
      $region17: #{conv_block_forward.3} parent=11 // pred_check
        %p137 = pneg %p91
      $region18: #{conv_block_forward.3} parent=11 // pred_check_branch
        %139 = sbr.rel (%p137) target = $region20
      $region19: #{conv_block_forward.3} parent=11 // pred_region
        _
      $region20: #{conv_block_forward.3} parent=11 // pred_fallthru
        _
    $region12: #{conv_block_forward.3} parent=5 // pred_fallthru
      _
    %p140 = scmp.lt.s32.totalorder %s9, 2
    // Predicated region
    $region21: #{conv_block_forward.3} parent=5 // pred_check
      %p141 = pneg %p140
    $region22: #{conv_block_forward.3} parent=5 // pred_check_branch
      %143 = sbr.rel (%p141) target = $region24
    $region23: #{conv_block_forward.3} parent=5 // pred_region
      // Predicated region
      $region25: #{conv_block_forward.3} parent=23 // pred_check
        %p144 = pneg %p43
      $region26: #{conv_block_forward.3} parent=23 // pred_check_branch
        %146 = sbr.rel (%p144) target = $region28
      $region27: #{conv_block_forward.3} parent=23 // pred_region
        %p147 = scmp.lt.s32.totalorder %s16, 1
        %s148 = scalar_select %p147, %s16, 1
        %p149 = scmp.lt.s32.totalorder %s17, 0
        %s150 = scalar_select %p149, %s17, 0
        %s151 = smul.addr %s150, 48
        %s152 = smul.addr %s148, 48
        %s153 = sadd.s32 %s151, %s152
        %s154 = smul.addr %s153, 4
        %s155 = scalar_lea.vmem %s0, %s154
      $region28: #{conv_block_forward.3} parent=23 // pred_fallthru
        _
    $region24: #{conv_block_forward.3} parent=5 // pred_fallthru
      _
    %p156 = scmp.le.s32.totalorder 1, %s9
    %p157 = scmp.lt.s32.totalorder %s9, 3
    %p158 = pnand %p156, %p157
    %p159 = pneg %p158
    // Predicated region
    $region29: #{conv_block_forward.3} parent=5 // pred_check
      _
    $region30: #{conv_block_forward.3} parent=5 // pred_check_branch
      %161 = sbr.rel (%p158) target = $region32
    $region31: #{conv_block_forward.3} parent=5 // pred_region
      %s162 = ssub.s32 %s9, 1
      %p163 = scmp.lt.s32.totalorder %s18, 1
      %s164 = scalar_select %p163, %s18, 1
      %p165 = scmp.lt.s32.totalorder %s19, 0
      %s166 = scalar_select %p165, %s19, 0
      %s167 = smul.addr %s166, 48
      %s168 = smul.addr %s164, 48
      %s169 = sadd.s32 %s167, %s168
      %s170 = smul.addr %s169, 4
      %s171 = scalar_lea.vmem %s0, %s170
      %p172 = pneg %p49
      %p173 = pneg %p46
      %p174 = pneg %p70
      %p175 = pneg %p67
      %p176 = pneg %p91
      %p177 = pneg %p88
      %p178 = pneg %p119
      %p179 = pneg %p116
      %p180 = scmp.lt.s32.totalorder %s18, 1
      %s181 = scalar_select %p180, %s18, 1
      %p182 = scmp.lt.s32.totalorder %s19, 0
      %s183 = scalar_select %p182, %s19, 0
      %s184 = smul.addr %s183, 48
      %s185 = smul.addr %s181, 48
      %s186 = sadd.s32 %s184, %s185
      %s187 = smul.addr %s186, 4
      %s188 = scalar_lea.vmem %s3, %s187
      %p189 = scmp.lt.s32.totalorder %s18, 1
      %s190 = scalar_select %p189, %s18, 1
      %p191 = scmp.lt.s32.totalorder %s19, 0
      %s192 = scalar_select %p191, %s19, 0
      %s193 = smul.addr %s192, 48
      %s194 = smul.addr %s190, 48
      %s195 = sadd.s32 %s193, %s194
      %s196 = smul.addr %s195, 4
      %s197 = scalar_lea.vmem %s0, %s196
      %p198 = scmp.lt.s32.totalorder %s18, 1
      %s199 = scalar_select %p198, %s18, 1
      %p200 = scmp.lt.s32.totalorder %s19, 0
      %s201 = scalar_select %p200, %s19, 0
      %s202 = smul.addr %s201, 48
      %s203 = smul.addr %s199, 48
      %s204 = sadd.s32 %s202, %s203
      %s205 = smul.addr %s204, 4
      %s206 = scalar_lea.vmem %s3, %s205
      %v207 = vld [vmem:[%s197] sm:$0xf]
      %v208 = vld [vmem:[%s197 + $0x4] sm:$0xf]
      %v209 = vld [vmem:[%s197 + $0x8] sm:$0xf]
      %v210 = vld [vmem:[%s197 + $0xc] sm:$0xf]
      %v211 = vld [vmem:[%s197 + $0x10] sm:$0xf]
      %v212 = vld [vmem:[%s197 + $0x14] sm:$0xf]
      %v213 = vld [vmem:[%s197 + $0x18] sm:$0xf]
      %v214 = vld [vmem:[%s197 + $0x1c] sm:$0xf]
      %v215 = vld [vmem:[%s197 + $0x20] sm:$0xf]
      %v216 = vld [vmem:[%s197 + $0x24] sm:$0xf]
      %v217 = vld [vmem:[%s197 + $0x28] sm:$0xf]
      %v218 = vld [vmem:[%s197 + $0x2c] sm:$0xf]
      %v219 = vld [vmem:[%s197 + $0x30] sm:$0xf]
      %v220 = vld [vmem:[%s197 + $0x34] sm:$0xf]
      %v221 = vld [vmem:[%s197 + $0x38] sm:$0xf]
      %v222 = vld [vmem:[%s197 + $0x3c] sm:$0xf]
      %v223 = vld [vmem:[%s197 + $0x40] sm:$0xf]
      %v224 = vld [vmem:[%s197 + $0x44] sm:$0xf]
      %v225 = vld [vmem:[%s197 + $0x48] sm:$0xf]
      %v226 = vld [vmem:[%s197 + $0x4c] sm:$0xf]
      %v227 = vld [vmem:[%s197 + $0x50] sm:$0xf]
      %v228 = vld [vmem:[%s197 + $0x54] sm:$0xf]
      %v229 = vld [vmem:[%s197 + $0x58] sm:$0xf]
      %v230 = vld [vmem:[%s197 + $0x5c] sm:$0xf]
      %v231 = vld [vmem:[%s197 + $0x60] sm:$0xf]
      %v232 = vld [vmem:[%s197 + $0x64] sm:$0xf]
      %v233 = vld [vmem:[%s197 + $0x68] sm:$0xf]
      %v234 = vld [vmem:[%s197 + $0x6c] sm:$0xf]
      %v235 = vld [vmem:[%s197 + $0x70] sm:$0xf]
      %v236 = vld [vmem:[%s197 + $0x74] sm:$0xf]
      %v237 = vld [vmem:[%s197 + $0x78] sm:$0xf]
      %v238 = vld [vmem:[%s197 + $0x7c] sm:$0xf]
      %v239 = vld [vmem:[%s197 + $0x80] sm:$0xf]
      %v240 = vld [vmem:[%s197 + $0x84] sm:$0xf]
      %v241 = vld [vmem:[%s197 + $0x88] sm:$0xf]
      %v242 = vld [vmem:[%s197 + $0x8c] sm:$0xf]
      %v243 = vld [vmem:[%s197 + $0x90] sm:$0xf]
      %v244 = vld [vmem:[%s197 + $0x94] sm:$0xf]
      %v245 = vld [vmem:[%s197 + $0x98] sm:$0xf]
      %v246 = vld [vmem:[%s197 + $0x9c] sm:$0xf]
      %v247 = vld [vmem:[%s197 + $0xa0] sm:$0xf]
      %v248 = vld [vmem:[%s197 + $0xa4] sm:$0xf]
      %v249 = vld [vmem:[%s197 + $0xa8] sm:$0xf]
      %v250 = vld [vmem:[%s197 + $0xac] sm:$0xf]
      %v251 = vld [vmem:[%s197 + $0xb0] sm:$0xf]
      %v252 = vld [vmem:[%s197 + $0xb4] sm:$0xf]
      %v253 = vld [vmem:[%s197 + $0xb8] sm:$0xf]
      %v254 = vld [vmem:[%s197 + $0xbc] sm:$0xf]
      %v255 = vunpack.c.l.bf16 %v207
      %v256 = vunpack.c.l.bf16 %v208
      %v257 = vunpack.c.l.bf16 %v209
      %v258 = vunpack.c.l.bf16 %v210
      %v259 = vunpack.c.l.bf16 %v211
      %v260 = vunpack.c.l.bf16 %v212
      %v261 = vunpack.c.l.bf16 %v213
      %v262 = vunpack.c.l.bf16 %v214
      %v263 = vunpack.c.l.bf16 %v215
      %v264 = vunpack.c.l.bf16 %v216
      %v265 = vunpack.c.l.bf16 %v217
      %v266 = vunpack.c.l.bf16 %v218
      %v267 = vunpack.c.l.bf16 %v219
      %v268 = vunpack.c.l.bf16 %v220
      %v269 = vunpack.c.l.bf16 %v221
      %v270 = vunpack.c.l.bf16 %v222
      %v271 = vunpack.c.l.bf16 %v223
      %v272 = vunpack.c.l.bf16 %v224
      %v273 = vunpack.c.l.bf16 %v225
      %v274 = vunpack.c.l.bf16 %v226
      %v275 = vunpack.c.l.bf16 %v227
      %v276 = vunpack.c.l.bf16 %v228
      %v277 = vunpack.c.l.bf16 %v229
      %v278 = vunpack.c.l.bf16 %v230
      %v279 = vunpack.c.l.bf16 %v231
      %v280 = vunpack.c.l.bf16 %v232
      %v281 = vunpack.c.l.bf16 %v233
      %v282 = vunpack.c.l.bf16 %v234
      %v283 = vunpack.c.l.bf16 %v235
      %v284 = vunpack.c.l.bf16 %v236
      %v285 = vunpack.c.l.bf16 %v237
      %v286 = vunpack.c.l.bf16 %v238
      %v287 = vunpack.c.l.bf16 %v239
      %v288 = vunpack.c.l.bf16 %v240
      %v289 = vunpack.c.l.bf16 %v241
      %v290 = vunpack.c.l.bf16 %v242
      %v291 = vunpack.c.l.bf16 %v243
      %v292 = vunpack.c.l.bf16 %v244
      %v293 = vunpack.c.l.bf16 %v245
      %v294 = vunpack.c.l.bf16 %v246
      %v295 = vunpack.c.l.bf16 %v247
      %v296 = vunpack.c.l.bf16 %v248
      %v297 = vunpack.c.l.bf16 %v249
      %v298 = vunpack.c.l.bf16 %v250
      %v299 = vunpack.c.l.bf16 %v251
      %v300 = vunpack.c.l.bf16 %v252
      %v301 = vunpack.c.l.bf16 %v253
      %v302 = vunpack.c.l.bf16 %v254
      %v303 = vld [vmem:[%s1] sm:$0x1]
      %v305 = vlaneseq
      %v306 = vshrl.u32 %v305, 7
      %v307 = vsub.s32 0, %v306
      %v308 = vrot.slane %v303, %v307
      %v310 = vmul.f32 %v255, %v308
      %v311 = vmul.f32 %v256, %v308
      %v312 = vmul.f32 %v257, %v308
      %v313 = vmul.f32 %v258, %v308
      %v314 = vmul.f32 %v259, %v308
      %v315 = vmul.f32 %v260, %v308
      %v316 = vmul.f32 %v261, %v308
      %v317 = vmul.f32 %v262, %v308
      %v318 = vmul.f32 %v263, %v308
      %v319 = vmul.f32 %v264, %v308
      %v320 = vmul.f32 %v265, %v308
      %v321 = vmul.f32 %v266, %v308
      %v322 = vmul.f32 %v267, %v308
      %v323 = vmul.f32 %v268, %v308
      %v324 = vmul.f32 %v269, %v308
      %v325 = vmul.f32 %v270, %v308
      %v326 = vmul.f32 %v271, %v308
      %v327 = vmul.f32 %v272, %v308
      %v328 = vmul.f32 %v273, %v308
      %v329 = vmul.f32 %v274, %v308
      %v330 = vmul.f32 %v275, %v308
      %v331 = vmul.f32 %v276, %v308
      %v332 = vmul.f32 %v277, %v308
      %v333 = vmul.f32 %v278, %v308
      %v334 = vmul.f32 %v279, %v308
      %v335 = vmul.f32 %v280, %v308
      %v336 = vmul.f32 %v281, %v308
      %v337 = vmul.f32 %v282, %v308
      %v338 = vmul.f32 %v283, %v308
      %v339 = vmul.f32 %v284, %v308
      %v340 = vmul.f32 %v285, %v308
      %v341 = vmul.f32 %v286, %v308
      %v342 = vmul.f32 %v287, %v308
      %v343 = vmul.f32 %v288, %v308
      %v344 = vmul.f32 %v289, %v308
      %v345 = vmul.f32 %v290, %v308
      %v346 = vmul.f32 %v291, %v308
      %v347 = vmul.f32 %v292, %v308
      %v348 = vmul.f32 %v293, %v308
      %v349 = vmul.f32 %v294, %v308
      %v350 = vmul.f32 %v295, %v308
      %v351 = vmul.f32 %v296, %v308
      %v352 = vmul.f32 %v297, %v308
      %v353 = vmul.f32 %v298, %v308
      %v354 = vmul.f32 %v299, %v308
      %v355 = vmul.f32 %v300, %v308
      %v356 = vmul.f32 %v301, %v308
      %v357 = vmul.f32 %v302, %v308
      %v358 = vld [vmem:[%s2] sm:$0x1]
      %v360 = vlaneseq
      %v361 = vshrl.u32 %v360, 7
      %v362 = vsub.s32 0, %v361
      %v363 = vrot.slane %v358, %v362
      %v365 = vadd.f32 %v310, %v363
      %v366 = vadd.f32 %v311, %v363
      %v367 = vadd.f32 %v312, %v363
      %v368 = vadd.f32 %v313, %v363
      %v369 = vadd.f32 %v314, %v363
      %v370 = vadd.f32 %v315, %v363
      %v371 = vadd.f32 %v316, %v363
      %v372 = vadd.f32 %v317, %v363
      %v373 = vadd.f32 %v318, %v363
      %v374 = vadd.f32 %v319, %v363
      %v375 = vadd.f32 %v320, %v363
      %v376 = vadd.f32 %v321, %v363
      %v377 = vadd.f32 %v322, %v363
      %v378 = vadd.f32 %v323, %v363
      %v379 = vadd.f32 %v324, %v363
      %v380 = vadd.f32 %v325, %v363
      %v381 = vadd.f32 %v326, %v363
      %v382 = vadd.f32 %v327, %v363
      %v383 = vadd.f32 %v328, %v363
      %v384 = vadd.f32 %v329, %v363
      %v385 = vadd.f32 %v330, %v363
      %v386 = vadd.f32 %v331, %v363
      %v387 = vadd.f32 %v332, %v363
      %v388 = vadd.f32 %v333, %v363
      %v389 = vadd.f32 %v334, %v363
      %v390 = vadd.f32 %v335, %v363
      %v391 = vadd.f32 %v336, %v363
      %v392 = vadd.f32 %v337, %v363
      %v393 = vadd.f32 %v338, %v363
      %v394 = vadd.f32 %v339, %v363
      %v395 = vadd.f32 %v340, %v363
      %v396 = vadd.f32 %v341, %v363
      %v397 = vadd.f32 %v342, %v363
      %v398 = vadd.f32 %v343, %v363
      %v399 = vadd.f32 %v344, %v363
      %v400 = vadd.f32 %v345, %v363
      %v401 = vadd.f32 %v346, %v363
      %v402 = vadd.f32 %v347, %v363
      %v403 = vadd.f32 %v348, %v363
      %v404 = vadd.f32 %v349, %v363
      %v405 = vadd.f32 %v350, %v363
      %v406 = vadd.f32 %v351, %v363
      %v407 = vadd.f32 %v352, %v363
      %v408 = vadd.f32 %v353, %v363
      %v409 = vadd.f32 %v354, %v363
      %v410 = vadd.f32 %v355, %v363
      %v411 = vadd.f32 %v356, %v363
      %v412 = vadd.f32 %v357, %v363
      %v413 = vmax.f32 %v365, 0.0
      %v414 = vmax.f32 %v366, 0.0
      %v415 = vmax.f32 %v367, 0.0
      %v416 = vmax.f32 %v368, 0.0
      %v417 = vmax.f32 %v369, 0.0
      %v418 = vmax.f32 %v370, 0.0
      %v419 = vmax.f32 %v371, 0.0
      %v420 = vmax.f32 %v372, 0.0
      %v421 = vmax.f32 %v373, 0.0
      %v422 = vmax.f32 %v374, 0.0
      %v423 = vmax.f32 %v375, 0.0
      %v424 = vmax.f32 %v376, 0.0
      %v425 = vmax.f32 %v377, 0.0
      %v426 = vmax.f32 %v378, 0.0
      %v427 = vmax.f32 %v379, 0.0
      %v428 = vmax.f32 %v380, 0.0
      %v429 = vmax.f32 %v381, 0.0
      %v430 = vmax.f32 %v382, 0.0
      %v431 = vmax.f32 %v383, 0.0
      %v432 = vmax.f32 %v384, 0.0
      %v433 = vmax.f32 %v385, 0.0
      %v434 = vmax.f32 %v386, 0.0
      %v435 = vmax.f32 %v387, 0.0
      %v436 = vmax.f32 %v388, 0.0
      %v437 = vmax.f32 %v389, 0.0
      %v438 = vmax.f32 %v390, 0.0
      %v439 = vmax.f32 %v391, 0.0
      %v440 = vmax.f32 %v392, 0.0
      %v441 = vmax.f32 %v393, 0.0
      %v442 = vmax.f32 %v394, 0.0
      %v443 = vmax.f32 %v395, 0.0
      %v444 = vmax.f32 %v396, 0.0
      %v445 = vmax.f32 %v397, 0.0
      %v446 = vmax.f32 %v398, 0.0
      %v447 = vmax.f32 %v399, 0.0
      %v448 = vmax.f32 %v400, 0.0
      %v449 = vmax.f32 %v401, 0.0
      %v450 = vmax.f32 %v402, 0.0
      %v451 = vmax.f32 %v403, 0.0
      %v452 = vmax.f32 %v404, 0.0
      %v453 = vmax.f32 %v405, 0.0
      %v454 = vmax.f32 %v406, 0.0
      %v455 = vmax.f32 %v407, 0.0
      %v456 = vmax.f32 %v408, 0.0
      %v457 = vmax.f32 %v409, 0.0
      %v458 = vmax.f32 %v410, 0.0
      %v459 = vmax.f32 %v411, 0.0
      %v460 = vmax.f32 %v412, 0.0
      %v461 = vpack.c.bf16 %v414, %v413
      %v462 = vpack.c.bf16 %v416, %v415
      %v463 = vpack.c.bf16 %v418, %v417
      %v464 = vpack.c.bf16 %v420, %v419
      %v465 = vpack.c.bf16 %v422, %v421
      %v466 = vpack.c.bf16 %v424, %v423
      %v467 = vpack.c.bf16 %v426, %v425
      %v468 = vpack.c.bf16 %v428, %v427
      %v469 = vpack.c.bf16 %v430, %v429
      %v470 = vpack.c.bf16 %v432, %v431
      %v471 = vpack.c.bf16 %v434, %v433
      %v472 = vpack.c.bf16 %v436, %v435
      %v473 = vpack.c.bf16 %v438, %v437
      %v474 = vpack.c.bf16 %v440, %v439
      %v475 = vpack.c.bf16 %v442, %v441
      %v476 = vpack.c.bf16 %v444, %v443
      %v477 = vpack.c.bf16 %v446, %v445
      %v478 = vpack.c.bf16 %v448, %v447
      %v479 = vpack.c.bf16 %v450, %v449
      %v480 = vpack.c.bf16 %v452, %v451
      %v481 = vpack.c.bf16 %v454, %v453
      %v482 = vpack.c.bf16 %v456, %v455
      %v483 = vpack.c.bf16 %v458, %v457
      %v484 = vpack.c.bf16 %v460, %v459
      %v509 = vunpack.c.l.b16 %v461
      %v510 = vunpack.c.h.b16 %v461
      %v511 = vunpack.c.l.b16 %v462
      %v512 = vunpack.c.h.b16 %v462
      %v513 = vunpack.c.l.b16 %v463
      %v514 = vunpack.c.h.b16 %v463
      %v515 = vunpack.c.l.b16 %v464
      %v516 = vunpack.c.h.b16 %v464
      %v517 = vunpack.c.l.b16 %v465
      %v518 = vunpack.c.h.b16 %v465
      %v519 = vunpack.c.l.b16 %v466
      %v520 = vunpack.c.h.b16 %v466
      %v521 = vunpack.c.l.b16 %v467
      %v522 = vunpack.c.h.b16 %v467
      %v523 = vunpack.c.l.b16 %v468
      %v524 = vunpack.c.h.b16 %v468
      %v525 = vunpack.c.l.b16 %v469
      %v526 = vunpack.c.h.b16 %v469
      %v527 = vunpack.c.l.b16 %v470
      %v528 = vunpack.c.h.b16 %v470
      %v529 = vunpack.c.l.b16 %v471
      %v530 = vunpack.c.h.b16 %v471
      %v531 = vunpack.c.l.b16 %v472
      %v532 = vunpack.c.h.b16 %v472
      %v533 = vunpack.c.l.b16 %v473
      %v534 = vunpack.c.h.b16 %v473
      %v535 = vunpack.c.l.b16 %v474
      %v536 = vunpack.c.h.b16 %v474
      %v537 = vunpack.c.l.b16 %v475
      %v538 = vunpack.c.h.b16 %v475
      %v539 = vunpack.c.l.b16 %v476
      %v540 = vunpack.c.h.b16 %v476
      %v541 = vunpack.c.l.b16 %v477
      %v542 = vunpack.c.h.b16 %v477
      %v543 = vunpack.c.l.b16 %v478
      %v544 = vunpack.c.h.b16 %v478
      %v545 = vunpack.c.l.b16 %v479
      %v546 = vunpack.c.h.b16 %v479
      %v547 = vunpack.c.l.b16 %v480
      %v548 = vunpack.c.h.b16 %v480
      %v549 = vunpack.c.l.b16 %v481
      %v550 = vunpack.c.h.b16 %v481
      %v551 = vunpack.c.l.b16 %v482
      %v552 = vunpack.c.h.b16 %v482
      %v553 = vunpack.c.l.b16 %v483
      %v554 = vunpack.c.h.b16 %v483
      %v555 = vunpack.c.l.b16 %v484
      %v556 = vunpack.c.h.b16 %v484
      %v557 = vpack.c.b16 %v509, %v509
      %v558 = vpack.c.b16 %v510, %v510
      %v559 = vpack.c.b16 %v511, %v511
      %v560 = vpack.c.b16 %v512, %v512
      %v561 = vpack.c.b16 %v513, %v513
      %v562 = vpack.c.b16 %v514, %v514
      %v563 = vpack.c.b16 %v515, %v515
      %v564 = vpack.c.b16 %v516, %v516
      %v565 = vpack.c.b16 %v517, %v517
      %v566 = vpack.c.b16 %v518, %v518
      %v567 = vpack.c.b16 %v519, %v519
      %v568 = vpack.c.b16 %v520, %v520
      %v569 = vpack.c.b16 %v521, %v521
      %v570 = vpack.c.b16 %v522, %v522
      %v571 = vpack.c.b16 %v523, %v523
      %v572 = vpack.c.b16 %v524, %v524
      %v573 = vpack.c.b16 %v525, %v525
      %v574 = vpack.c.b16 %v526, %v526
      %v575 = vpack.c.b16 %v527, %v527
      %v576 = vpack.c.b16 %v528, %v528
      %v577 = vpack.c.b16 %v529, %v529
      %v578 = vpack.c.b16 %v530, %v530
      %v579 = vpack.c.b16 %v531, %v531
      %v580 = vpack.c.b16 %v532, %v532
      %v581 = vpack.c.b16 %v533, %v533
      %v582 = vpack.c.b16 %v534, %v534
      %v583 = vpack.c.b16 %v535, %v535
      %v584 = vpack.c.b16 %v536, %v536
      %v585 = vpack.c.b16 %v537, %v537
      %v586 = vpack.c.b16 %v538, %v538
      %v587 = vpack.c.b16 %v539, %v539
      %v588 = vpack.c.b16 %v540, %v540
      %v589 = vpack.c.b16 %v541, %v541
      %v590 = vpack.c.b16 %v542, %v542
      %v591 = vpack.c.b16 %v543, %v543
      %v592 = vpack.c.b16 %v544, %v544
      %v593 = vpack.c.b16 %v545, %v545
      %v594 = vpack.c.b16 %v546, %v546
      %v595 = vpack.c.b16 %v547, %v547
      %v596 = vpack.c.b16 %v548, %v548
      %v597 = vpack.c.b16 %v549, %v549
      %v598 = vpack.c.b16 %v550, %v550
      %v599 = vpack.c.b16 %v551, %v551
      %v600 = vpack.c.b16 %v552, %v552
      %v601 = vpack.c.b16 %v553, %v553
      %v602 = vpack.c.b16 %v554, %v554
      %v603 = vpack.c.b16 %v555, %v555
      %v604 = vpack.c.b16 %v556, %v556
      %653 = vst [vmem:[%s206] sm:$0xf] %v557
      %654 = vst [vmem:[%s206 + $0x4] sm:$0xf] %v558
      %655 = vst [vmem:[%s206 + $0x8] sm:$0xf] %v559
      %656 = vst [vmem:[%s206 + $0xc] sm:$0xf] %v560
      %657 = vst [vmem:[%s206 + $0x10] sm:$0xf] %v561
      %658 = vst [vmem:[%s206 + $0x14] sm:$0xf] %v562
      %659 = vst [vmem:[%s206 + $0x18] sm:$0xf] %v563
      %660 = vst [vmem:[%s206 + $0x1c] sm:$0xf] %v564
      %661 = vst [vmem:[%s206 + $0x20] sm:$0xf] %v565
      %662 = vst [vmem:[%s206 + $0x24] sm:$0xf] %v566
      %663 = vst [vmem:[%s206 + $0x28] sm:$0xf] %v567
      %664 = vst [vmem:[%s206 + $0x2c] sm:$0xf] %v568
      %665 = vst [vmem:[%s206 + $0x30] sm:$0xf] %v569
      %666 = vst [vmem:[%s206 + $0x34] sm:$0xf] %v570
      %667 = vst [vmem:[%s206 + $0x38] sm:$0xf] %v571
      %668 = vst [vmem:[%s206 + $0x3c] sm:$0xf] %v572
      %669 = vst [vmem:[%s206 + $0x40] sm:$0xf] %v573
      %670 = vst [vmem:[%s206 + $0x44] sm:$0xf] %v574
      %671 = vst [vmem:[%s206 + $0x48] sm:$0xf] %v575
      %672 = vst [vmem:[%s206 + $0x4c] sm:$0xf] %v576
      %673 = vst [vmem:[%s206 + $0x50] sm:$0xf] %v577
      %674 = vst [vmem:[%s206 + $0x54] sm:$0xf] %v578
      %675 = vst [vmem:[%s206 + $0x58] sm:$0xf] %v579
      %676 = vst [vmem:[%s206 + $0x5c] sm:$0xf] %v580
      %677 = vst [vmem:[%s206 + $0x60] sm:$0xf] %v581
      %678 = vst [vmem:[%s206 + $0x64] sm:$0xf] %v582
      %679 = vst [vmem:[%s206 + $0x68] sm:$0xf] %v583
      %680 = vst [vmem:[%s206 + $0x6c] sm:$0xf] %v584
      %681 = vst [vmem:[%s206 + $0x70] sm:$0xf] %v585
      %682 = vst [vmem:[%s206 + $0x74] sm:$0xf] %v586
      %683 = vst [vmem:[%s206 + $0x78] sm:$0xf] %v587
      %684 = vst [vmem:[%s206 + $0x7c] sm:$0xf] %v588
      %685 = vst [vmem:[%s206 + $0x80] sm:$0xf] %v589
      %686 = vst [vmem:[%s206 + $0x84] sm:$0xf] %v590
      %687 = vst [vmem:[%s206 + $0x88] sm:$0xf] %v591
      %688 = vst [vmem:[%s206 + $0x8c] sm:$0xf] %v592
      %689 = vst [vmem:[%s206 + $0x90] sm:$0xf] %v593
      %690 = vst [vmem:[%s206 + $0x94] sm:$0xf] %v594
      %691 = vst [vmem:[%s206 + $0x98] sm:$0xf] %v595
      %692 = vst [vmem:[%s206 + $0x9c] sm:$0xf] %v596
      %693 = vst [vmem:[%s206 + $0xa0] sm:$0xf] %v597
      %694 = vst [vmem:[%s206 + $0xa4] sm:$0xf] %v598
      %695 = vst [vmem:[%s206 + $0xa8] sm:$0xf] %v599
      %696 = vst [vmem:[%s206 + $0xac] sm:$0xf] %v600
      %697 = vst [vmem:[%s206 + $0xb0] sm:$0xf] %v601
      %698 = vst [vmem:[%s206 + $0xb4] sm:$0xf] %v602
      %699 = vst [vmem:[%s206 + $0xb8] sm:$0xf] %v603
      %700 = vst [vmem:[%s206 + $0xbc] sm:$0xf] %v604
      %p701 = scmp.lt.s32.totalorder %s18, 1
      %s702 = scalar_select %p701, %s18, 1
      %p703 = scmp.lt.s32.totalorder %s19, 0
      %s704 = scalar_select %p703, %s19, 0
      %s705 = smul.addr %s704, 48
      %s706 = smul.addr %s702, 48
      %s707 = sadd.s32 %s705, %s706
      %s708 = smul.addr %s707, 4
      %s709 = scalar_lea.vmem %s3, %s708
      // Predicated region
      $region33: #{conv_block_forward.3} parent=31 // pred_check
        %p710 = pneg %p116
      $region34: #{conv_block_forward.3} parent=31 // pred_check_branch
        %712 = sbr.rel (%p710) target = $region36
      $region35: #{conv_block_forward.3} parent=31 // pred_region
        _
      $region36: #{conv_block_forward.3} parent=31 // pred_fallthru
        _
    $region32: #{conv_block_forward.3} parent=5 // pred_fallthru
      _
    %p713 = scmp.le.s32.totalorder 2, %s9
    // Predicated region
    $region37: #{conv_block_forward.3} parent=5 // pred_check
      %p714 = pneg %p713
    $region38: #{conv_block_forward.3} parent=5 // pred_check_branch
      %716 = sbr.rel (%p714) target = $region40
    $region39: #{conv_block_forward.3} parent=5 // pred_region
      %s717 = ssub.s32 %s9, 2
      // Predicated region
      $region41: #{conv_block_forward.3} parent=39 // pred_check
        %p718 = pneg %p122
      $region42: #{conv_block_forward.3} parent=39 // pred_check_branch
        %720 = sbr.rel (%p718) target = $region44
      $region43: #{conv_block_forward.3} parent=39 // pred_region
        %p721 = scmp.lt.s32.totalorder %s20, 1
        %s722 = scalar_select %p721, %s20, 1
        %p723 = scmp.lt.s32.totalorder %s21, 0
        %s724 = scalar_select %p723, %s21, 0
        %s725 = smul.addr %s724, 48
        %s726 = smul.addr %s722, 48
        %s727 = sadd.s32 %s725, %s726
        %s728 = smul.addr %s727, 4
        %s729 = scalar_lea.vmem %s3, %s728
      $region44: #{conv_block_forward.3} parent=39 // pred_fallthru
        _
    $region40: #{conv_block_forward.3} parent=5 // pred_fallthru
      _
  $region6: #{conv_block_forward.3} parent=0 // loop_footer
    %s13 = sadd.s32 1, %s9
  $region7: #{conv_block_forward.3} parent=0 // loop_footer_branch
    %8 = sbr.rel target = $region3
  $region8: #{conv_block_forward.3} parent=0 // loop_exit
    _

// kernel: conv_block_forward.2
$region0: #{conv_block_forward.2}
  #allocation0 [shape = 'u32[]', space=smem, size = 0x4, offset = 0x4, fixed_abs, tag = 'smem constant byte address 0x4 - core index']
  #allocation1 [shape = 'u32[144,128]{1,0:T(1,128)}', space=vmem, size = 0x12000, scoped, tag = 'internal scratch']
  #allocation2 [shape = 'f32[384,128]{1,0:T(8,128)}', space=vmem, size = 0x30000, scoped, tag = 'scratch operand']
  %s0 = inlined_call_operand.vmem [shape: bf16[2,1,384,128], index: 0, kind: input, shape index: {}]
  %s1 = inlined_call_operand.vmem [shape: bf16[1,128,128], index: 1, kind: input, shape index: {}]
  %s2 = inlined_call_operand.vmem [shape: f32[1,384,1], index: 2, kind: input, shape index: {}]
  %s3 = inlined_call_operand.vmem [shape: bf16[2,1,384,128], index: 3, kind: output, shape index: {0}]
  %s4 = inlined_call_operand.vmem [shape: f32[2,1,1,128], index: 4, kind: output, shape index: {1}]
  %s5 = inlined_call_operand.vmem [shape: f32[2,1,1,128], index: 5, kind: output, shape index: {2}]
  %6 = xla_tuple %s3, %s4, %s5
  %s7 = sld [smem:[#allocation0]]
  $region61: #{conv_block_forward.2} parent=0
    _
  %s9 = ssub.s32 1, %s7
  %s10 = scalar_select 0, %s9, %s7
  loop: start=0, step=1, limit=4
  $region2: #{conv_block_forward.2} parent=0 // loop_pre_header
    _
  $region3: #{conv_block_forward.2} parent=0 // loop_header
    %s12 = sphi 0, %s16
    %p13 = scmp.ge.s32.totalorder %s12, 4
    %s19 = sphi 0, %s31
    %s20 = sphi 0, %s27
    %s21 = sphi 0, %s19
    %s22 = sphi 0, %s20
    %s23 = sphi 0, %s21
    %s24 = sphi 0, %s22
    %s36 = sphi 0, %s38
    %s39 = sphi 0, %s36
    %s40 = sphi 0, %s39
    %s56 = sphi 0, %s40
    %s60 = sphi 0, %s60
    %s62 = sphi 0, %s60
    %s63 = sphi 0, %s62
    %s77 = sphi 0, %s63
    %s83 = sphi 0, %s85
    %s86 = sphi 0, %s83
    %s87 = sphi 0, %s86
    %s103 = sphi 0, %s87
    %s111 = sphi 0, %s113
    %s114 = sphi 0, %s111
    %s115 = sphi 0, %s114
    %s131 = sphi 0, %s115
    %s139 = sphi 0, %s141
    %s142 = sphi 0, %s139
    %s143 = sphi 0, %s142
    %s159 = sphi 0, %s143
    %s167 = sphi 0, %s169
    %s170 = sphi 0, %s167
    %s171 = sphi 0, %s170
    %s187 = sphi 0, %s171
  $region4: #{conv_block_forward.2} parent=0 // loop_header_branch
    %15 = sbr.rel (%p13) target = $region8
  $region5: #{conv_block_forward.2} parent=0 // loop_body
    %s17 = ssub.s32 %s12, 1
    %s18 = ssub.s32 %s12, 2
    %s25 = sadd.s32 1, %s20
    %p26 = scmp.ge.s32.totalorder %s25, 1
    %s27 = scalar_select %p26, 0, %s25
    %s28 = sadd.s32 1, %s19
    %s29 = scalar_select %p26, %s28, %s19
    %p30 = scmp.ge.s32.totalorder %s29, 2
    %s31 = scalar_select %p30, 0, %s29
    %s32 = ssub.s32 %s19, %s31
    %s33 = ssub.s32 %s20, %s27
    %s34 = sor.u32 %s32, %s33
    %p35 = scmp.eq.s32.totalorder %s34, 0
    %s37 = sadd.s32 %s36, 1
    %s38 = scalar_select %p35, %s36, %s37
    %p41 = pneg %p35
    %p42 = scmp.eq.s32.totalorder %s12, 1
    %p43 = por %p41, %p42
    %p44 = scmp.ne.s32.totalorder %s36, %s39
    %p45 = scmp.eq.s32.totalorder %s12, 0
    %p46 = por %p44, %p45
    %p47 = scmp.ne.s32.totalorder %s36, %s39
    %p48 = scmp.eq.s32.totalorder %s17, 1
    %p49 = por %p47, %p48
    %p50 = scmp.ne.s32.totalorder %s39, %s40
    %p51 = scmp.eq.s32.totalorder %s17, 0
    %p52 = por %p50, %p51
    %p53 = scmp.ne.s32.totalorder %s39, %s40
    %p54 = scmp.eq.s32.totalorder %s18, 1
    %p55 = por %p53, %p54
    %p57 = scmp.ne.s32.totalorder %s40, %s56
    %p58 = scmp.eq.s32.totalorder %s18, 0
    %p59 = por %p57, %p58
    %s61 = sadd.s32 %s60, 1
    %p64 = scmp.eq.s32.totalorder %s12, 1
    %p65 = scmp.ne.s32.totalorder %s60, %s62
    %p66 = scmp.eq.s32.totalorder %s12, 0
    %p67 = por %p65, %p66
    %p68 = scmp.ne.s32.totalorder %s60, %s62
    %p69 = scmp.eq.s32.totalorder %s17, 1
    %p70 = por %p68, %p69
    %p71 = scmp.ne.s32.totalorder %s62, %s63
    %p72 = scmp.eq.s32.totalorder %s17, 0
    %p73 = por %p71, %p72
    %p74 = scmp.ne.s32.totalorder %s62, %s63
    %p75 = scmp.eq.s32.totalorder %s18, 1
    %p76 = por %p74, %p75
    %p78 = scmp.ne.s32.totalorder %s63, %s77
    %p79 = scmp.eq.s32.totalorder %s18, 0
    %p80 = por %p78, %p79
    %s81 = ssub.s32 %s20, %s27
    %p82 = scmp.eq.s32.totalorder %s81, 0
    %s84 = sadd.s32 %s83, 1
    %s85 = scalar_select %p82, %s83, %s84
    %p88 = pneg %p82
    %p89 = scmp.eq.s32.totalorder %s12, 1
    %p90 = por %p88, %p89
    %p91 = scmp.ne.s32.totalorder %s83, %s86
    %p92 = scmp.eq.s32.totalorder %s12, 0
    %p93 = por %p91, %p92
    %p94 = scmp.ne.s32.totalorder %s83, %s86
    %p95 = scmp.eq.s32.totalorder %s17, 1
    %p96 = por %p94, %p95
    %p97 = scmp.ne.s32.totalorder %s86, %s87
    %p98 = scmp.eq.s32.totalorder %s17, 0
    %p99 = por %p97, %p98
    %p100 = scmp.ne.s32.totalorder %s86, %s87
    %p101 = scmp.eq.s32.totalorder %s18, 1
    %p102 = por %p100, %p101
    %p104 = scmp.ne.s32.totalorder %s87, %s103
    %p105 = scmp.eq.s32.totalorder %s18, 0
    %p106 = por %p104, %p105
    %s107 = ssub.s32 %s19, %s31
    %s108 = ssub.s32 %s20, %s27
    %s109 = sor.u32 %s107, %s108
    %p110 = scmp.eq.s32.totalorder %s109, 0
    %s112 = sadd.s32 %s111, 1
    %s113 = scalar_select %p110, %s111, %s112
    %p116 = pneg %p110
    %p117 = scmp.eq.s32.totalorder %s12, 1
    %p118 = por %p116, %p117
    %p119 = scmp.ne.s32.totalorder %s111, %s114
    %p120 = scmp.eq.s32.totalorder %s12, 0
    %p121 = por %p119, %p120
    %p122 = scmp.ne.s32.totalorder %s111, %s114
    %p123 = scmp.eq.s32.totalorder %s17, 1
    %p124 = por %p122, %p123
    %p125 = scmp.ne.s32.totalorder %s114, %s115
    %p126 = scmp.eq.s32.totalorder %s17, 0
    %p127 = por %p125, %p126
    %p128 = scmp.ne.s32.totalorder %s114, %s115
    %p129 = scmp.eq.s32.totalorder %s18, 1
    %p130 = por %p128, %p129
    %p132 = scmp.ne.s32.totalorder %s115, %s131
    %p133 = scmp.eq.s32.totalorder %s18, 0
    %p134 = por %p132, %p133
    %s135 = ssub.s32 %s19, %s31
    %s136 = ssub.s32 %s20, %s27
    %s137 = sor.u32 %s135, %s136
    %p138 = scmp.eq.s32.totalorder %s137, 0
    %s140 = sadd.s32 %s139, 1
    %s141 = scalar_select %p138, %s139, %s140
    %p144 = pneg %p138
    %p145 = scmp.eq.s32.totalorder %s12, 1
    %p146 = por %p144, %p145
    %p147 = scmp.ne.s32.totalorder %s139, %s142
    %p148 = scmp.eq.s32.totalorder %s12, 0
    %p149 = por %p147, %p148
    %p150 = scmp.ne.s32.totalorder %s139, %s142
    %p151 = scmp.eq.s32.totalorder %s17, 1
    %p152 = por %p150, %p151
    %p153 = scmp.ne.s32.totalorder %s142, %s143
    %p154 = scmp.eq.s32.totalorder %s17, 0
    %p155 = por %p153, %p154
    %p156 = scmp.ne.s32.totalorder %s142, %s143
    %p157 = scmp.eq.s32.totalorder %s18, 1
    %p158 = por %p156, %p157
    %p160 = scmp.ne.s32.totalorder %s143, %s159
    %p161 = scmp.eq.s32.totalorder %s18, 0
    %p162 = por %p160, %p161
    %s163 = ssub.s32 %s19, %s31
    %s164 = ssub.s32 %s20, %s27
    %s165 = sor.u32 %s163, %s164
    %p166 = scmp.eq.s32.totalorder %s165, 0
    %s168 = sadd.s32 %s167, 1
    %s169 = scalar_select %p166, %s167, %s168
    %p172 = pneg %p166
    %p173 = scmp.eq.s32.totalorder %s12, 1
    %p174 = por %p172, %p173
    %p175 = scmp.ne.s32.totalorder %s167, %s170
    %p176 = scmp.eq.s32.totalorder %s12, 0
    %p177 = por %p175, %p176
    %p178 = scmp.ne.s32.totalorder %s167, %s170
    %p179 = scmp.eq.s32.totalorder %s17, 1
    %p180 = por %p178, %p179
    %p181 = scmp.ne.s32.totalorder %s170, %s171
    %p182 = scmp.eq.s32.totalorder %s17, 0
    %p183 = por %p181, %p182
    %p184 = scmp.ne.s32.totalorder %s170, %s171
    %p185 = scmp.eq.s32.totalorder %s18, 1
    %p186 = por %p184, %p185
    %p188 = scmp.ne.s32.totalorder %s171, %s187
    %p189 = scmp.eq.s32.totalorder %s18, 0
    %p190 = por %p188, %p189
    %p191 = scmp.le.s32.totalorder 1, %s12
    %p192 = scmp.lt.s32.totalorder %s12, 3
    %p193 = pnand %p191, %p192
    %p194 = pneg %p193
    // Predicated region
    $region9: #{conv_block_forward.2} parent=5 // pred_check
      _
    $region10: #{conv_block_forward.2} parent=5 // pred_check_branch
      %196 = sbr.rel (%p193) target = $region12
    $region11: #{conv_block_forward.2} parent=5 // pred_region
      %s197 = ssub.s32 %s12, 1
      // Predicated region
      $region13: #{conv_block_forward.2} parent=11 // pred_check
        %p198 = pneg %p73
      $region14: #{conv_block_forward.2} parent=11 // pred_check_branch
        %200 = sbr.rel (%p198) target = $region16
      $region15: #{conv_block_forward.2} parent=11 // pred_region
        _
      $region16: #{conv_block_forward.2} parent=11 // pred_fallthru
        _
      // Predicated region
      $region17: #{conv_block_forward.2} parent=11 // pred_check
        %p201 = pneg %p99
      $region18: #{conv_block_forward.2} parent=11 // pred_check_branch
        %203 = sbr.rel (%p201) target = $region20
      $region19: #{conv_block_forward.2} parent=11 // pred_region
        %p204 = scmp.lt.s32.totalorder %s22, 0
        %s205 = scalar_select %p204, %s22, 0
        %s206 = smul.addr %s205, 48
        %s207 = smul.addr %s206, 8
        %s208 = scalar_lea.vmem %s2, %s207
      $region20: #{conv_block_forward.2} parent=11 // pred_fallthru
        _
    $region12: #{conv_block_forward.2} parent=5 // pred_fallthru
      _
    %p209 = scmp.lt.s32.totalorder %s12, 2
    // Predicated region
    $region21: #{conv_block_forward.2} parent=5 // pred_check
      %p210 = pneg %p209
    $region22: #{conv_block_forward.2} parent=5 // pred_check_branch
      %212 = sbr.rel (%p210) target = $region24
    $region23: #{conv_block_forward.2} parent=5 // pred_region
      // Predicated region
      $region25: #{conv_block_forward.2} parent=23 // pred_check
        %p213 = pneg %p46
      $region26: #{conv_block_forward.2} parent=23 // pred_check_branch
        %215 = sbr.rel (%p213) target = $region28
      $region27: #{conv_block_forward.2} parent=23 // pred_region
        %p216 = scmp.lt.s32.totalorder %s19, 1
        %s217 = scalar_select %p216, %s19, 1
        %p218 = scmp.lt.s32.totalorder %s20, 0
        %s219 = scalar_select %p218, %s20, 0
        %s220 = smul.addr %s219, 48
        %s221 = smul.addr %s217, 48
        %s222 = sadd.s32 %s220, %s221
        %s223 = smul.addr %s222, 4
        %s224 = scalar_lea.vmem %s0, %s223
      $region28: #{conv_block_forward.2} parent=23 // pred_fallthru
        _
    $region24: #{conv_block_forward.2} parent=5 // pred_fallthru
      _
    %p225 = scmp.le.s32.totalorder 1, %s12
    %p226 = scmp.lt.s32.totalorder %s12, 3
    %p227 = pnand %p225, %p226
    %p228 = pneg %p227
    // Predicated region
    $region29: #{conv_block_forward.2} parent=5 // pred_check
      _
    $region30: #{conv_block_forward.2} parent=5 // pred_check_branch
      %230 = sbr.rel (%p227) target = $region32
    $region31: #{conv_block_forward.2} parent=5 // pred_region
      %s231 = ssub.s32 %s12, 1
      %p232 = scmp.lt.s32.totalorder %s21, 1
      %s233 = scalar_select %p232, %s21, 1
      %p234 = scmp.lt.s32.totalorder %s22, 0
      %s235 = scalar_select %p234, %s22, 0
      %s236 = smul.addr %s235, 48
      %s237 = smul.addr %s233, 48
      %s238 = sadd.s32 %s236, %s237
      %s239 = smul.addr %s238, 4
      %s240 = scalar_lea.vmem %s0, %s239
      %p241 = pneg %p52
      %p242 = pneg %p49
      %p243 = pneg %p73
      %p244 = pneg %p70
      %p245 = scmp.lt.s32.totalorder %s22, 0
      %s246 = scalar_select %p245, %s22, 0
      %s247 = smul.addr %s246, 48
      %s248 = smul.addr %s247, 8
      %s249 = scalar_lea.vmem %s2, %s248
      %p250 = pneg %p99
      %p251 = pneg %p96
      %p252 = pneg %p127
      %p253 = pneg %p124
      %p254 = scmp.lt.s32.totalorder %s21, 1
      %s255 = scalar_select %p254, %s21, 1
      %p256 = scmp.lt.s32.totalorder %s22, 0
      %s257 = scalar_select %p256, %s22, 0
      %s258 = smul.addr %s257, 48
      %s259 = smul.addr %s255, 48
      %s260 = sadd.s32 %s258, %s259
      %s261 = smul.addr %s260, 4
      %s262 = scalar_lea.vmem %s3, %s261
      %p263 = pneg %p155
      %p264 = pneg %p152
      %p265 = scmp.lt.s32.totalorder %s21, 1
      %s266 = scalar_select %p265, %s21, 1
      %p267 = scmp.lt.s32.totalorder %s22, 0
      %s268 = scalar_select %p267, %s22, 0
      %s269 = sadd.s32 %s268, %s266
      %s270 = scalar_lea.vmem %s4, %s269
      %p271 = pneg %p183
      %p272 = pneg %p180
      %p273 = scmp.lt.s32.totalorder %s21, 1
      %s274 = scalar_select %p273, %s21, 1
      %p275 = scmp.lt.s32.totalorder %s22, 0
      %s276 = scalar_select %p275, %s22, 0
      %s277 = sadd.s32 %s276, %s274
      %s278 = scalar_lea.vmem %s5, %s277
      %p279 = scmp.lt.s32.totalorder %s21, 1
      %s280 = scalar_select %p279, %s21, 1
      %p281 = scmp.lt.s32.totalorder %s22, 0
      %s282 = scalar_select %p281, %s22, 0
      %s283 = smul.addr %s282, 48
      %s284 = smul.addr %s280, 48
      %s285 = sadd.s32 %s283, %s284
      %s286 = smul.addr %s285, 4
      %s287 = scalar_lea.vmem %s0, %s286
      %p288 = scmp.lt.s32.totalorder %s22, 0
      %s289 = scalar_select %p288, %s22, 0
      %s290 = smul.addr %s289, 48
      %s291 = smul.addr %s290, 8
      %s292 = scalar_lea.vmem %s2, %s291
      %p293 = scmp.lt.s32.totalorder %s21, 1
      %s294 = scalar_select %p293, %s21, 1
      %p295 = scmp.lt.s32.totalorder %s22, 0
      %s296 = scalar_select %p295, %s22, 0
      %s297 = smul.addr %s296, 48
      %s298 = smul.addr %s294, 48
      %s299 = sadd.s32 %s297, %s298
      %s300 = smul.addr %s299, 4
      %s301 = scalar_lea.vmem %s3, %s300
      %p302 = scmp.lt.s32.totalorder %s21, 1
      %s303 = scalar_select %p302, %s21, 1
      %p304 = scmp.lt.s32.totalorder %s22, 0
      %s305 = scalar_select %p304, %s22, 0
      %s306 = sadd.s32 %s305, %s303
      %s307 = scalar_lea.vmem %s4, %s306
      %p308 = scmp.lt.s32.totalorder %s21, 1
      %s309 = scalar_select %p308, %s21, 1
      %p310 = scmp.lt.s32.totalorder %s22, 0
      %s311 = scalar_select %p310, %s22, 0
      %s312 = sadd.s32 %s311, %s309
      %s313 = scalar_lea.vmem %s5, %s312
      %v315 = vld [vmem:[%s287] sm:$0xf]
      %v316 = vld [vmem:[%s287 + $0x4] sm:$0xf]
      %v317 = vld [vmem:[%s287 + $0x8] sm:$0xf]
      %v318 = vld [vmem:[%s287 + $0xc] sm:$0xf]
      %v319 = vld [vmem:[%s287 + $0x10] sm:$0xf]
      %v320 = vld [vmem:[%s287 + $0x14] sm:$0xf]
      %v321 = vld [vmem:[%s287 + $0x18] sm:$0xf]
      %v322 = vld [vmem:[%s287 + $0x1c] sm:$0xf]
      %v323 = vld [vmem:[%s287 + $0x20] sm:$0xf]
      %v324 = vld [vmem:[%s287 + $0x24] sm:$0xf]
      %v325 = vld [vmem:[%s287 + $0x28] sm:$0xf]
      %v326 = vld [vmem:[%s287 + $0x2c] sm:$0xf]
      %v327 = vld [vmem:[%s287 + $0x30] sm:$0xf]
      %v328 = vld [vmem:[%s287 + $0x34] sm:$0xf]
      %v329 = vld [vmem:[%s287 + $0x38] sm:$0xf]
      %v330 = vld [vmem:[%s287 + $0x3c] sm:$0xf]
      %v331 = vld [vmem:[%s287 + $0x40] sm:$0xf]
      %v332 = vld [vmem:[%s287 + $0x44] sm:$0xf]
      %v333 = vld [vmem:[%s287 + $0x48] sm:$0xf]
      %v334 = vld [vmem:[%s287 + $0x4c] sm:$0xf]
      %v335 = vld [vmem:[%s287 + $0x50] sm:$0xf]
      %v336 = vld [vmem:[%s287 + $0x54] sm:$0xf]
      %v337 = vld [vmem:[%s287 + $0x58] sm:$0xf]
      %v338 = vld [vmem:[%s287 + $0x5c] sm:$0xf]
      %v339 = vld [vmem:[%s287 + $0x60] sm:$0xf]
      %v340 = vld [vmem:[%s287 + $0x64] sm:$0xf]
      %v341 = vld [vmem:[%s287 + $0x68] sm:$0xf]
      %v342 = vld [vmem:[%s287 + $0x6c] sm:$0xf]
      %v343 = vld [vmem:[%s287 + $0x70] sm:$0xf]
      %v344 = vld [vmem:[%s287 + $0x74] sm:$0xf]
      %v345 = vld [vmem:[%s287 + $0x78] sm:$0xf]
      %v346 = vld [vmem:[%s287 + $0x7c] sm:$0xf]
      %v347 = vld [vmem:[%s287 + $0x80] sm:$0xf]
      %v348 = vld [vmem:[%s287 + $0x84] sm:$0xf]
      %v349 = vld [vmem:[%s287 + $0x88] sm:$0xf]
      %v350 = vld [vmem:[%s287 + $0x8c] sm:$0xf]
      %v351 = vld [vmem:[%s287 + $0x90] sm:$0xf]
      %v352 = vld [vmem:[%s287 + $0x94] sm:$0xf]
      %v353 = vld [vmem:[%s287 + $0x98] sm:$0xf]
      %v354 = vld [vmem:[%s287 + $0x9c] sm:$0xf]
      %v355 = vld [vmem:[%s287 + $0xa0] sm:$0xf]
      %v356 = vld [vmem:[%s287 + $0xa4] sm:$0xf]
      %v357 = vld [vmem:[%s287 + $0xa8] sm:$0xf]
      %v358 = vld [vmem:[%s287 + $0xac] sm:$0xf]
      %v359 = vld [vmem:[%s287 + $0xb0] sm:$0xf]
      %v360 = vld [vmem:[%s287 + $0xb4] sm:$0xf]
      %v361 = vld [vmem:[%s287 + $0xb8] sm:$0xf]
      %v362 = vld [vmem:[%s287 + $0xbc] sm:$0xf]
      %v363 = vld [vmem:[%s1] sm:$0xf]
      %v364 = vld [vmem:[%s1 + $0x4] sm:$0xf]
      %v365 = vld [vmem:[%s1 + $0x8] sm:$0xf]
      %v366 = vld [vmem:[%s1 + $0xc] sm:$0xf]
      %v367 = vld [vmem:[%s1 + $0x10] sm:$0xf]
      %v368 = vld [vmem:[%s1 + $0x14] sm:$0xf]
      %v369 = vld [vmem:[%s1 + $0x18] sm:$0xf]
      %v370 = vld [vmem:[%s1 + $0x1c] sm:$0xf]
      %v371 = vld [vmem:[%s1 + $0x20] sm:$0xf]
      %v372 = vld [vmem:[%s1 + $0x24] sm:$0xf]
      %v373 = vld [vmem:[%s1 + $0x28] sm:$0xf]
      %v374 = vld [vmem:[%s1 + $0x2c] sm:$0xf]
      %v375 = vld [vmem:[%s1 + $0x30] sm:$0xf]
      %v376 = vld [vmem:[%s1 + $0x34] sm:$0xf]
      %v377 = vld [vmem:[%s1 + $0x38] sm:$0xf]
      %v378 = vld [vmem:[%s1 + $0x3c] sm:$0xf]
      %v427 = vunpack.c.l.b16 %v315
      %v428 = vunpack.c.l.b16 %v316
      %v429 = vunpack.c.l.b16 %v317
      %v430 = vunpack.c.l.b16 %v318
      %v431 = vunpack.c.l.b16 %v319
      %v432 = vunpack.c.l.b16 %v320
      %v433 = vunpack.c.l.b16 %v321
      %v434 = vunpack.c.l.b16 %v322
      %v435 = vunpack.c.l.b16 %v323
      %v436 = vunpack.c.l.b16 %v324
      %v437 = vunpack.c.l.b16 %v325
      %v438 = vunpack.c.l.b16 %v326
      %v439 = vunpack.c.l.b16 %v327
      %v440 = vunpack.c.l.b16 %v328
      %v441 = vunpack.c.l.b16 %v329
      %v442 = vunpack.c.l.b16 %v330
      %v443 = vunpack.c.l.b16 %v331
      %v444 = vunpack.c.l.b16 %v332
      %v445 = vunpack.c.l.b16 %v333
      %v446 = vunpack.c.l.b16 %v334
      %v447 = vunpack.c.l.b16 %v335
      %v448 = vunpack.c.l.b16 %v336
      %v449 = vunpack.c.l.b16 %v337
      %v450 = vunpack.c.l.b16 %v338
      %v451 = vunpack.c.l.b16 %v339
      %v452 = vunpack.c.l.b16 %v340
      %v453 = vunpack.c.l.b16 %v341
      %v454 = vunpack.c.l.b16 %v342
      %v455 = vunpack.c.l.b16 %v343
      %v456 = vunpack.c.l.b16 %v344
      %v457 = vunpack.c.l.b16 %v345
      %v458 = vunpack.c.l.b16 %v346
      %v459 = vunpack.c.l.b16 %v347
      %v460 = vunpack.c.l.b16 %v348
      %v461 = vunpack.c.l.b16 %v349
      %v462 = vunpack.c.l.b16 %v350
      %v463 = vunpack.c.l.b16 %v351
      %v464 = vunpack.c.l.b16 %v352
      %v465 = vunpack.c.l.b16 %v353
      %v466 = vunpack.c.l.b16 %v354
      %v467 = vunpack.c.l.b16 %v355
      %v468 = vunpack.c.l.b16 %v356
      %v469 = vunpack.c.l.b16 %v357
      %v470 = vunpack.c.l.b16 %v358
      %v471 = vunpack.c.l.b16 %v359
      %v472 = vunpack.c.l.b16 %v360
      %v473 = vunpack.c.l.b16 %v361
      %v474 = vunpack.c.l.b16 %v362
      %v475 = vpack.c.b16 %v428, %v427
      %v476 = vpack.c.b16 %v430, %v429
      %v477 = vpack.c.b16 %v432, %v431
      %v478 = vpack.c.b16 %v434, %v433
      %v479 = vpack.c.b16 %v436, %v435
      %v480 = vpack.c.b16 %v438, %v437
      %v481 = vpack.c.b16 %v440, %v439
      %v482 = vpack.c.b16 %v442, %v441
      %v483 = vpack.c.b16 %v444, %v443
      %v484 = vpack.c.b16 %v446, %v445
      %v485 = vpack.c.b16 %v448, %v447
      %v486 = vpack.c.b16 %v450, %v449
      %v487 = vpack.c.b16 %v452, %v451
      %v488 = vpack.c.b16 %v454, %v453
      %v489 = vpack.c.b16 %v456, %v455
      %v490 = vpack.c.b16 %v458, %v457
      %v491 = vpack.c.b16 %v460, %v459
      %v492 = vpack.c.b16 %v462, %v461
      %v493 = vpack.c.b16 %v464, %v463
      %v494 = vpack.c.b16 %v466, %v465
      %v495 = vpack.c.b16 %v468, %v467
      %v496 = vpack.c.b16 %v470, %v469
      %v497 = vpack.c.b16 %v472, %v471
      %v498 = vpack.c.b16 %v474, %v473
      %v539 = vunpack.c.l.b16 %v363
      %v540 = vunpack.c.l.b16 %v364
      %v541 = vunpack.c.l.b16 %v365
      %v542 = vunpack.c.l.b16 %v366
      %v543 = vunpack.c.l.b16 %v367
      %v544 = vunpack.c.l.b16 %v368
      %v545 = vunpack.c.l.b16 %v369
      %v546 = vunpack.c.l.b16 %v370
      %v547 = vunpack.c.l.b16 %v371
      %v548 = vunpack.c.l.b16 %v372
      %v549 = vunpack.c.l.b16 %v373
      %v550 = vunpack.c.l.b16 %v374
      %v551 = vunpack.c.l.b16 %v375
      %v552 = vunpack.c.l.b16 %v376
      %v553 = vunpack.c.l.b16 %v377
      %v554 = vunpack.c.l.b16 %v378
      %v555 = vpack.c.b16 %v540, %v539
      %v556 = vpack.c.b16 %v542, %v541
      %v557 = vpack.c.b16 %v544, %v543
      %v558 = vpack.c.b16 %v546, %v545
      %v559 = vpack.c.b16 %v548, %v547
      %v560 = vpack.c.b16 %v550, %v549
      %v561 = vpack.c.b16 %v552, %v551
      %v562 = vpack.c.b16 %v554, %v553
      %571 = vmatprep.subr.bf16.mxu0 0
      %572 = vmatpush1.bf16.msra.mxu0 %v555
      %573 = vmatprep.subr.bf16.mxu0 0
      %574 = vmatpush1.bf16.msra.mxu0 %v556
      %575 = vmatprep.subr.bf16.mxu0 0
      %576 = vmatpush1.bf16.msra.mxu0 %v557
      %577 = vmatprep.subr.bf16.mxu0 0
      %578 = vmatpush1.bf16.msra.mxu0 %v558
      %579 = vmatprep.subr.bf16.mxu0 0
      %580 = vmatpush1.bf16.msra.mxu0 %v559
      %581 = vmatprep.subr.bf16.mxu0 0
      %582 = vmatpush1.bf16.msra.mxu0 %v560
      %583 = vmatprep.subr.bf16.mxu0 0
      %584 = vmatpush1.bf16.msra.mxu0 %v561
      %585 = vmatprep.subr.bf16.mxu0 0
      %586 = vmatpush1.bf16.msra.mxu0 %v562
      %587 = vmatprep.subr.bf16.mxu0 0
      %588 = vmatpush1.bf16.msra.mxu0 0
      %589 = vmatprep.subr.bf16.mxu0 0
      %590 = vmatpush1.bf16.msra.mxu0 0
      %591 = vmatprep.subr.bf16.mxu0 0
      %592 = vmatpush1.bf16.msra.mxu0 0
      %593 = vmatprep.subr.bf16.mxu0 0
      %594 = vmatpush1.bf16.msra.mxu0 0
      %595 = vmatprep.subr.bf16.mxu0 0
      %596 = vmatpush1.bf16.msra.mxu0 0
      %597 = vmatprep.subr.bf16.mxu0 0
      %598 = vmatpush1.bf16.msra.mxu0 0
      %599 = vmatprep.subr.bf16.mxu0 0
      %600 = vmatpush1.bf16.msra.mxu0 0
      %601 = vmatprep.subr.bf16.mxu0 0
      %602 = vmatpush1.bf16.msra.mxu0 0
      %603 = vmatprep.mubr.bf16.mxu0 0
      %604 = vmatmul.mubr.bf16.gmra.mrb[0].mxu0 %v475
      %v605 = vpop.f32.mrb[0].mxu0
      %v606 = vadd.f32 0.0, %v605
      %v607 = vpop.f32.mrb[0].mxu0
      %v608 = vpop.f32.mrb[0].mxu0
      %v609 = vadd.f32 0.0, %v608
      %v610 = vpop.f32.mrb[0].mxu0
      %611 = vmatprep.mubr.bf16.mxu0 0
      %612 = vmatmul.mubr.bf16.gmra.mrb[0].mxu0 %v476
      %v613 = vpop.f32.mrb[0].mxu0
      %v614 = vadd.f32 0.0, %v613
      %v615 = vpop.f32.mrb[0].mxu0
      %v616 = vpop.f32.mrb[0].mxu0
      %v617 = vadd.f32 0.0, %v616
      %v618 = vpop.f32.mrb[0].mxu0
      %619 = vmatprep.mubr.bf16.mxu0 0
      %620 = vmatmul.mubr.bf16.gmra.mrb[0].mxu0 %v477
      %v621 = vpop.f32.mrb[0].mxu0
      %v622 = vadd.f32 0.0, %v621
      %v623 = vpop.f32.mrb[0].mxu0
      %v624 = vpop.f32.mrb[0].mxu0
      %v625 = vadd.f32 0.0, %v624
      %v626 = vpop.f32.mrb[0].mxu0
      %627 = vmatprep.mubr.bf16.mxu0 0
      %628 = vmatmul.mubr.bf16.gmra.mrb[0].mxu0 %v478
      %v629 = vpop.f32.mrb[0].mxu0
      %v630 = vadd.f32 0.0, %v629
      %v631 = vpop.f32.mrb[0].mxu0
      %v632 = vpop.f32.mrb[0].mxu0
      %v633 = vadd.f32 0.0, %v632
      %v634 = vpop.f32.mrb[0].mxu0
      %635 = vmatprep.mubr.bf16.mxu0 0
      %636 = vmatmul.mubr.bf16.gmra.mrb[0].mxu0 %v479
      %v637 = vpop.f32.mrb[0].mxu0
      %v638 = vadd.f32 0.0, %v637
      %v639 = vpop.f32.mrb[0].mxu0
      %v640 = vpop.f32.mrb[0].mxu0
      %v641 = vadd.f32 0.0, %v640
      %v642 = vpop.f32.mrb[0].mxu0
      %643 = vmatprep.mubr.bf16.mxu0 0
      %644 = vmatmul.mubr.bf16.gmra.mrb[0].mxu0 %v480
      %v645 = vpop.f32.mrb[0].mxu0
      %v646 = vadd.f32 0.0, %v645
      %v647 = vpop.f32.mrb[0].mxu0
      %v648 = vpop.f32.mrb[0].mxu0
      %v649 = vadd.f32 0.0, %v648
      %v650 = vpop.f32.mrb[0].mxu0
      %651 = vmatprep.mubr.bf16.mxu0 0
      %652 = vmatmul.mubr.bf16.gmra.mrb[0].mxu0 %v481
      %v653 = vpop.f32.mrb[0].mxu0
      %v654 = vadd.f32 0.0, %v653
      %v655 = vpop.f32.mrb[0].mxu0
      %v656 = vpop.f32.mrb[0].mxu0
      %v657 = vadd.f32 0.0, %v656
      %v658 = vpop.f32.mrb[0].mxu0
      %659 = vmatprep.mubr.bf16.mxu0 0
      %660 = vmatmul.mubr.bf16.gmra.mrb[0].mxu0 %v482
      %v661 = vpop.f32.mrb[0].mxu0
      %v662 = vadd.f32 0.0, %v661
      %v663 = vpop.f32.mrb[0].mxu0
      %v664 = vpop.f32.mrb[0].mxu0
      %v665 = vadd.f32 0.0, %v664
      %v666 = vpop.f32.mrb[0].mxu0
      %667 = vmatprep.mubr.bf16.mxu0 0
      %668 = vmatmul.mubr.bf16.gmra.mrb[0].mxu0 %v483
      %v669 = vpop.f32.mrb[0].mxu0
      %v670 = vadd.f32 0.0, %v669
      %v671 = vpop.f32.mrb[0].mxu0
      %v672 = vpop.f32.mrb[0].mxu0
      %v673 = vadd.f32 0.0, %v672
      %v674 = vpop.f32.mrb[0].mxu0
      %675 = vmatprep.mubr.bf16.mxu0 0
      %676 = vmatmul.mubr.bf16.gmra.mrb[0].mxu0 %v484
      %v677 = vpop.f32.mrb[0].mxu0
      %v678 = vadd.f32 0.0, %v677
      %v679 = vpop.f32.mrb[0].mxu0
      %v680 = vpop.f32.mrb[0].mxu0
      %v681 = vadd.f32 0.0, %v680
      %v682 = vpop.f32.mrb[0].mxu0
      %683 = vmatprep.mubr.bf16.mxu0 0
      %684 = vmatmul.mubr.bf16.gmra.mrb[0].mxu0 %v485
      %v685 = vpop.f32.mrb[0].mxu0
      %v686 = vadd.f32 0.0, %v685
      %v687 = vpop.f32.mrb[0].mxu0
      %v688 = vpop.f32.mrb[0].mxu0
      %v689 = vadd.f32 0.0, %v688
      %v690 = vpop.f32.mrb[0].mxu0
      %691 = vmatprep.mubr.bf16.mxu0 0
      %692 = vmatmul.mubr.bf16.gmra.mrb[0].mxu0 %v486
      %v693 = vpop.f32.mrb[0].mxu0
      %v694 = vadd.f32 0.0, %v693
      %v695 = vpop.f32.mrb[0].mxu0
      %v696 = vpop.f32.mrb[0].mxu0
      %v697 = vadd.f32 0.0, %v696
      %v698 = vpop.f32.mrb[0].mxu0
      %699 = vmatprep.mubr.bf16.mxu0 0
      %700 = vmatmul.mubr.bf16.gmra.mrb[0].mxu0 %v487
      %v701 = vpop.f32.mrb[0].mxu0
      %v702 = vadd.f32 0.0, %v701
      %v703 = vpop.f32.mrb[0].mxu0
      %v704 = vpop.f32.mrb[0].mxu0
      %v705 = vadd.f32 0.0, %v704
      %v706 = vpop.f32.mrb[0].mxu0
      %707 = vmatprep.mubr.bf16.mxu0 0
      %708 = vmatmul.mubr.bf16.gmra.mrb[0].mxu0 %v488
      %v709 = vpop.f32.mrb[0].mxu0
      %v710 = vadd.f32 0.0, %v709
      %v711 = vpop.f32.mrb[0].mxu0
      %v712 = vpop.f32.mrb[0].mxu0
      %v713 = vadd.f32 0.0, %v712
      %v714 = vpop.f32.mrb[0].mxu0
      %715 = vmatprep.mubr.bf16.mxu0 0
      %716 = vmatmul.mubr.bf16.gmra.mrb[0].mxu0 %v489
      %v717 = vpop.f32.mrb[0].mxu0
      %v718 = vadd.f32 0.0, %v717
      %v719 = vpop.f32.mrb[0].mxu0
      %v720 = vpop.f32.mrb[0].mxu0
      %v721 = vadd.f32 0.0, %v720
      %v722 = vpop.f32.mrb[0].mxu0
      %723 = vmatprep.mubr.bf16.mxu0 0
      %724 = vmatmul.mubr.bf16.gmra.mrb[0].mxu0 %v490
      %v725 = vpop.f32.mrb[0].mxu0
      %v726 = vadd.f32 0.0, %v725
      %v727 = vpop.f32.mrb[0].mxu0
      %v728 = vpop.f32.mrb[0].mxu0
      %v729 = vadd.f32 0.0, %v728
      %v730 = vpop.f32.mrb[0].mxu0
      %731 = vmatprep.mubr.bf16.mxu0 0
      %732 = vmatmul.mubr.bf16.gmra.mrb[0].mxu0 %v491
      %v733 = vpop.f32.mrb[0].mxu0
      %v734 = vadd.f32 0.0, %v733
      %v735 = vpop.f32.mrb[0].mxu0
      %v736 = vpop.f32.mrb[0].mxu0
      %v737 = vadd.f32 0.0, %v736
      %v738 = vpop.f32.mrb[0].mxu0
      %739 = vmatprep.mubr.bf16.mxu0 0
      %740 = vmatmul.mubr.bf16.gmra.mrb[0].mxu0 %v492
      %v741 = vpop.f32.mrb[0].mxu0
      %v742 = vadd.f32 0.0, %v741
      %v743 = vpop.f32.mrb[0].mxu0
      %v744 = vpop.f32.mrb[0].mxu0
      %v745 = vadd.f32 0.0, %v744
      %v746 = vpop.f32.mrb[0].mxu0
      %747 = vmatprep.mubr.bf16.mxu0 0
      %748 = vmatmul.mubr.bf16.gmra.mrb[0].mxu0 %v493
      %v749 = vpop.f32.mrb[0].mxu0
      %v750 = vadd.f32 0.0, %v749
      %v751 = vpop.f32.mrb[0].mxu0
      %v752 = vpop.f32.mrb[0].mxu0
      %v753 = vadd.f32 0.0, %v752
      %v754 = vpop.f32.mrb[0].mxu0
      %755 = vmatprep.mubr.bf16.mxu0 0
      %756 = vmatmul.mubr.bf16.gmra.mrb[0].mxu0 %v494
      %v757 = vpop.f32.mrb[0].mxu0
      %v758 = vadd.f32 0.0, %v757
      %v759 = vpop.f32.mrb[0].mxu0
      %v760 = vpop.f32.mrb[0].mxu0
      %v761 = vadd.f32 0.0, %v760
      %v762 = vpop.f32.mrb[0].mxu0
      %763 = vmatprep.mubr.bf16.mxu0 0
      %764 = vmatmul.mubr.bf16.gmra.mrb[0].mxu0 %v495
      %v765 = vpop.f32.mrb[0].mxu0
      %v766 = vadd.f32 0.0, %v765
      %v767 = vpop.f32.mrb[0].mxu0
      %v768 = vpop.f32.mrb[0].mxu0
      %v769 = vadd.f32 0.0, %v768
      %v770 = vpop.f32.mrb[0].mxu0
      %771 = vmatprep.mubr.bf16.mxu0 0
      %772 = vmatmul.mubr.bf16.gmra.mrb[0].mxu0 %v496
      %v773 = vpop.f32.mrb[0].mxu0
      %v774 = vadd.f32 0.0, %v773
      %v775 = vpop.f32.mrb[0].mxu0
      %v776 = vpop.f32.mrb[0].mxu0
      %v777 = vadd.f32 0.0, %v776
      %v778 = vpop.f32.mrb[0].mxu0
      %779 = vmatprep.mubr.bf16.mxu0 0
      %780 = vmatmul.mubr.bf16.gmra.mrb[0].mxu0 %v497
      %v781 = vpop.f32.mrb[0].mxu0
      %v782 = vadd.f32 0.0, %v781
      %v783 = vpop.f32.mrb[0].mxu0
      %v784 = vpop.f32.mrb[0].mxu0
      %v785 = vadd.f32 0.0, %v784
      %v786 = vpop.f32.mrb[0].mxu0
      %787 = vmatprep.mubr.bf16.mxu0 0
      %788 = vmatmul.mubr.bf16.gmra.mrb[0].mxu0 %v498
      %v789 = vpop.f32.mrb[0].mxu0
      %v790 = vadd.f32 0.0, %v789
      %v791 = vpop.f32.mrb[0].mxu0
      %v792 = vpop.f32.mrb[0].mxu0
      %v793 = vadd.f32 0.0, %v792
      %v794 = vpop.f32.mrb[0].mxu0
      %795 = vdwg.mxu0
      %796 = vst [vmem:[#allocation2] sm:$0xff] %v606
      %797 = vst [vmem:[#allocation2 + $0x8] sm:$0xff] %v609
      %798 = vst [vmem:[#allocation2 + $0x10] sm:$0xff] %v614
      %799 = vst [vmem:[#allocation2 + $0x18] sm:$0xff] %v617
      %800 = vst [vmem:[#allocation2 + $0x20] sm:$0xff] %v622
      %801 = vst [vmem:[#allocation2 + $0x28] sm:$0xff] %v625
      %802 = vst [vmem:[#allocation2 + $0x30] sm:$0xff] %v630
      %803 = vst [vmem:[#allocation2 + $0x38] sm:$0xff] %v633
      %804 = vst [vmem:[#allocation2 + $0x40] sm:$0xff] %v638
      %805 = vst [vmem:[#allocation2 + $0x48] sm:$0xff] %v641
      %806 = vst [vmem:[#allocation2 + $0x50] sm:$0xff] %v646
      %807 = vst [vmem:[#allocation2 + $0x58] sm:$0xff] %v649
      %808 = vst [vmem:[#allocation2 + $0x60] sm:$0xff] %v654
      %809 = vst [vmem:[#allocation2 + $0x68] sm:$0xff] %v657
      %810 = vst [vmem:[#allocation2 + $0x70] sm:$0xff] %v662
      %811 = vst [vmem:[#allocation2 + $0x78] sm:$0xff] %v665
      %812 = vst [vmem:[#allocation2 + $0x80] sm:$0xff] %v670
      %813 = vst [vmem:[#allocation2 + $0x88] sm:$0xff] %v673
      %814 = vst [vmem:[#allocation2 + $0x90] sm:$0xff] %v678
      %815 = vst [vmem:[#allocation2 + $0x98] sm:$0xff] %v681
      %816 = vst [vmem:[#allocation2 + $0xa0] sm:$0xff] %v686
      %817 = vst [vmem:[#allocation2 + $0xa8] sm:$0xff] %v689
      %818 = vst [vmem:[#allocation2 + $0xb0] sm:$0xff] %v694
      %819 = vst [vmem:[#allocation2 + $0xb8] sm:$0xff] %v697
      %820 = vst [vmem:[#allocation2 + $0xc0] sm:$0xff] %v702
      %821 = vst [vmem:[#allocation2 + $0xc8] sm:$0xff] %v705
      %822 = vst [vmem:[#allocation2 + $0xd0] sm:$0xff] %v710
      %823 = vst [vmem:[#allocation2 + $0xd8] sm:$0xff] %v713
      %824 = vst [vmem:[#allocation2 + $0xe0] sm:$0xff] %v718
      %825 = vst [vmem:[#allocation2 + $0xe8] sm:$0xff] %v721
      %826 = vst [vmem:[#allocation2 + $0xf0] sm:$0xff] %v726
      %827 = vst [vmem:[#allocation2 + $0xf8] sm:$0xff] %v729
      %828 = vst [vmem:[#allocation2 + $0x100] sm:$0xff] %v734
      %829 = vst [vmem:[#allocation2 + $0x108] sm:$0xff] %v737
      %830 = vst [vmem:[#allocation2 + $0x110] sm:$0xff] %v742
      %831 = vst [vmem:[#allocation2 + $0x118] sm:$0xff] %v745
      %832 = vst [vmem:[#allocation2 + $0x120] sm:$0xff] %v750
      %833 = vst [vmem:[#allocation2 + $0x128] sm:$0xff] %v753
      %834 = vst [vmem:[#allocation2 + $0x130] sm:$0xff] %v758
      %835 = vst [vmem:[#allocation2 + $0x138] sm:$0xff] %v761
      %836 = vst [vmem:[#allocation2 + $0x140] sm:$0xff] %v766
      %837 = vst [vmem:[#allocation2 + $0x148] sm:$0xff] %v769
      %838 = vst [vmem:[#allocation2 + $0x150] sm:$0xff] %v774
      %839 = vst [vmem:[#allocation2 + $0x158] sm:$0xff] %v777
      %840 = vst [vmem:[#allocation2 + $0x160] sm:$0xff] %v782
      %841 = vst [vmem:[#allocation2 + $0x168] sm:$0xff] %v785
      %842 = vst [vmem:[#allocation2 + $0x170] sm:$0xff] %v790
      %843 = vst [vmem:[#allocation2 + $0x178] sm:$0xff] %v793
      %v844 = vld [vmem:[#allocation2] sm:$0xff]
      %v845 = vld [vmem:[#allocation2 + $0x8] sm:$0xff]
      %v846 = vld [vmem:[#allocation2 + $0x10] sm:$0xff]
      %v847 = vld [vmem:[#allocation2 + $0x18] sm:$0xff]
      %v848 = vld [vmem:[#allocation2 + $0x20] sm:$0xff]
      %v849 = vld [vmem:[#allocation2 + $0x28] sm:$0xff]
      %v850 = vld [vmem:[#allocation2 + $0x30] sm:$0xff]
      %v851 = vld [vmem:[#allocation2 + $0x38] sm:$0xff]
      %v852 = vld [vmem:[#allocation2 + $0x40] sm:$0xff]
      %v853 = vld [vmem:[#allocation2 + $0x48] sm:$0xff]
      %v854 = vld [vmem:[#allocation2 + $0x50] sm:$0xff]
      %v855 = vld [vmem:[#allocation2 + $0x58] sm:$0xff]
      %v856 = vld [vmem:[#allocation2 + $0x60] sm:$0xff]
      %v857 = vld [vmem:[#allocation2 + $0x68] sm:$0xff]
      %v858 = vld [vmem:[#allocation2 + $0x70] sm:$0xff]
      %v859 = vld [vmem:[#allocation2 + $0x78] sm:$0xff]
      %v860 = vld [vmem:[#allocation2 + $0x80] sm:$0xff]
      %v861 = vld [vmem:[#allocation2 + $0x88] sm:$0xff]
      %v862 = vld [vmem:[#allocation2 + $0x90] sm:$0xff]
      %v863 = vld [vmem:[#allocation2 + $0x98] sm:$0xff]
      %v864 = vld [vmem:[#allocation2 + $0xa0] sm:$0xff]
      %v865 = vld [vmem:[#allocation2 + $0xa8] sm:$0xff]
      %v866 = vld [vmem:[#allocation2 + $0xb0] sm:$0xff]
      %v867 = vld [vmem:[#allocation2 + $0xb8] sm:$0xff]
      %v868 = vld [vmem:[#allocation2 + $0xc0] sm:$0xff]
      %v869 = vld [vmem:[#allocation2 + $0xc8] sm:$0xff]
      %v870 = vld [vmem:[#allocation2 + $0xd0] sm:$0xff]
      %v871 = vld [vmem:[#allocation2 + $0xd8] sm:$0xff]
      %v872 = vld [vmem:[#allocation2 + $0xe0] sm:$0xff]
      %v873 = vld [vmem:[#allocation2 + $0xe8] sm:$0xff]
      %v874 = vld [vmem:[#allocation2 + $0xf0] sm:$0xff]
      %v875 = vld [vmem:[#allocation2 + $0xf8] sm:$0xff]
      %v876 = vld [vmem:[#allocation2 + $0x100] sm:$0xff]
      %v877 = vld [vmem:[#allocation2 + $0x108] sm:$0xff]
      %v878 = vld [vmem:[#allocation2 + $0x110] sm:$0xff]
      %v879 = vld [vmem:[#allocation2 + $0x118] sm:$0xff]
      %v880 = vld [vmem:[#allocation2 + $0x120] sm:$0xff]
      %v881 = vld [vmem:[#allocation2 + $0x128] sm:$0xff]
      %v882 = vld [vmem:[#allocation2 + $0x130] sm:$0xff]
      %v883 = vld [vmem:[#allocation2 + $0x138] sm:$0xff]
      %v884 = vld [vmem:[#allocation2 + $0x140] sm:$0xff]
      %v885 = vld [vmem:[#allocation2 + $0x148] sm:$0xff]
      %v886 = vld [vmem:[#allocation2 + $0x150] sm:$0xff]
      %v887 = vld [vmem:[#allocation2 + $0x158] sm:$0xff]
      %v888 = vld [vmem:[#allocation2 + $0x160] sm:$0xff]
      %v889 = vld [vmem:[#allocation2 + $0x168] sm:$0xff]
      %v890 = vld [vmem:[#allocation2 + $0x170] sm:$0xff]
      %v891 = vld [vmem:[#allocation2 + $0x178] sm:$0xff]
      %v892 = vld [vmem:[%s292] sm:$0xff]
      %v893 = vld [vmem:[%s292 + $0x8] sm:$0xff]
      %v894 = vld [vmem:[%s292 + $0x10] sm:$0xff]
      %v895 = vld [vmem:[%s292 + $0x18] sm:$0xff]
      %v896 = vld [vmem:[%s292 + $0x20] sm:$0xff]
      %v897 = vld [vmem:[%s292 + $0x28] sm:$0xff]
      %v898 = vld [vmem:[%s292 + $0x30] sm:$0xff]
      %v899 = vld [vmem:[%s292 + $0x38] sm:$0xff]
      %v900 = vld [vmem:[%s292 + $0x40] sm:$0xff]
      %v901 = vld [vmem:[%s292 + $0x48] sm:$0xff]
      %v902 = vld [vmem:[%s292 + $0x50] sm:$0xff]
      %v903 = vld [vmem:[%s292 + $0x58] sm:$0xff]
      %v904 = vld [vmem:[%s292 + $0x60] sm:$0xff]
      %v905 = vld [vmem:[%s292 + $0x68] sm:$0xff]
      %v906 = vld [vmem:[%s292 + $0x70] sm:$0xff]
      %v907 = vld [vmem:[%s292 + $0x78] sm:$0xff]
      %v908 = vld [vmem:[%s292 + $0x80] sm:$0xff]
      %v909 = vld [vmem:[%s292 + $0x88] sm:$0xff]
      %v910 = vld [vmem:[%s292 + $0x90] sm:$0xff]
      %v911 = vld [vmem:[%s292 + $0x98] sm:$0xff]
      %v912 = vld [vmem:[%s292 + $0xa0] sm:$0xff]
      %v913 = vld [vmem:[%s292 + $0xa8] sm:$0xff]
      %v914 = vld [vmem:[%s292 + $0xb0] sm:$0xff]
      %v915 = vld [vmem:[%s292 + $0xb8] sm:$0xff]
      %v916 = vld [vmem:[%s292 + $0xc0] sm:$0xff]
      %v917 = vld [vmem:[%s292 + $0xc8] sm:$0xff]
      %v918 = vld [vmem:[%s292 + $0xd0] sm:$0xff]
      %v919 = vld [vmem:[%s292 + $0xd8] sm:$0xff]
      %v920 = vld [vmem:[%s292 + $0xe0] sm:$0xff]
      %v921 = vld [vmem:[%s292 + $0xe8] sm:$0xff]
      %v922 = vld [vmem:[%s292 + $0xf0] sm:$0xff]
      %v923 = vld [vmem:[%s292 + $0xf8] sm:$0xff]
      %v924 = vld [vmem:[%s292 + $0x100] sm:$0xff]
      %v925 = vld [vmem:[%s292 + $0x108] sm:$0xff]
      %v926 = vld [vmem:[%s292 + $0x110] sm:$0xff]
      %v927 = vld [vmem:[%s292 + $0x118] sm:$0xff]
      %v928 = vld [vmem:[%s292 + $0x120] sm:$0xff]
      %v929 = vld [vmem:[%s292 + $0x128] sm:$0xff]
      %v930 = vld [vmem:[%s292 + $0x130] sm:$0xff]
      %v931 = vld [vmem:[%s292 + $0x138] sm:$0xff]
      %v932 = vld [vmem:[%s292 + $0x140] sm:$0xff]
      %v933 = vld [vmem:[%s292 + $0x148] sm:$0xff]
      %v934 = vld [vmem:[%s292 + $0x150] sm:$0xff]
      %v935 = vld [vmem:[%s292 + $0x158] sm:$0xff]
      %v936 = vld [vmem:[%s292 + $0x160] sm:$0xff]
      %v937 = vld [vmem:[%s292 + $0x168] sm:$0xff]
      %v938 = vld [vmem:[%s292 + $0x170] sm:$0xff]
      %v939 = vld [vmem:[%s292 + $0x178] sm:$0xff]
      %941 = vset.pattern.permute.xlu0 0
      %942 = vperm.xlu0 %941, %v892
      %v943 = vpop.permute.xlu0 %942
      %946 = vset.pattern.permute.xlu0 0
      %947 = vperm.xlu0 %946, %v893
      %v948 = vpop.permute.xlu0 %947
      %951 = vset.pattern.permute.xlu0 0
      %952 = vperm.xlu0 %951, %v894
      %v953 = vpop.permute.xlu0 %952
      %956 = vset.pattern.permute.xlu0 0
      %957 = vperm.xlu0 %956, %v895
      %v958 = vpop.permute.xlu0 %957
      %961 = vset.pattern.permute.xlu0 0
      %962 = vperm.xlu0 %961, %v896
      %v963 = vpop.permute.xlu0 %962
      %966 = vset.pattern.permute.xlu0 0
      %967 = vperm.xlu0 %966, %v897
      %v968 = vpop.permute.xlu0 %967
      %971 = vset.pattern.permute.xlu0 0
      %972 = vperm.xlu0 %971, %v898
      %v973 = vpop.permute.xlu0 %972
      %976 = vset.pattern.permute.xlu0 0
      %977 = vperm.xlu0 %976, %v899
      %v978 = vpop.permute.xlu0 %977
      %981 = vset.pattern.permute.xlu0 0
      %982 = vperm.xlu0 %981, %v900
      %v983 = vpop.permute.xlu0 %982
      %986 = vset.pattern.permute.xlu0 0
      %987 = vperm.xlu0 %986, %v901
      %v988 = vpop.permute.xlu0 %987
      %991 = vset.pattern.permute.xlu0 0
      %992 = vperm.xlu0 %991, %v902
      %v993 = vpop.permute.xlu0 %992
      %996 = vset.pattern.permute.xlu0 0
      %997 = vperm.xlu0 %996, %v903
      %v998 = vpop.permute.xlu0 %997
      %1001 = vset.pattern.permute.xlu0 0
      %1002 = vperm.xlu0 %1001, %v904
      %v1003 = vpop.permute.xlu0 %1002
      %1006 = vset.pattern.permute.xlu0 0
      %1007 = vperm.xlu0 %1006, %v905
      %v1008 = vpop.permute.xlu0 %1007
      %1011 = vset.pattern.permute.xlu0 0
      %1012 = vperm.xlu0 %1011, %v906
      %v1013 = vpop.permute.xlu0 %1012
      %1016 = vset.pattern.permute.xlu0 0
      %1017 = vperm.xlu0 %1016, %v907
      %v1018 = vpop.permute.xlu0 %1017
      %1021 = vset.pattern.permute.xlu0 0
      %1022 = vperm.xlu0 %1021, %v908
      %v1023 = vpop.permute.xlu0 %1022
      %1026 = vset.pattern.permute.xlu0 0
      %1027 = vperm.xlu0 %1026, %v909
      %v1028 = vpop.permute.xlu0 %1027
      %1031 = vset.pattern.permute.xlu0 0
      %1032 = vperm.xlu0 %1031, %v910
      %v1033 = vpop.permute.xlu0 %1032
      %1036 = vset.pattern.permute.xlu0 0
      %1037 = vperm.xlu0 %1036, %v911
      %v1038 = vpop.permute.xlu0 %1037
      %1041 = vset.pattern.permute.xlu0 0
      %1042 = vperm.xlu0 %1041, %v912
      %v1043 = vpop.permute.xlu0 %1042
      %1046 = vset.pattern.permute.xlu0 0
      %1047 = vperm.xlu0 %1046, %v913
      %v1048 = vpop.permute.xlu0 %1047
      %1051 = vset.pattern.permute.xlu0 0
      %1052 = vperm.xlu0 %1051, %v914
      %v1053 = vpop.permute.xlu0 %1052
      %1056 = vset.pattern.permute.xlu0 0
      %1057 = vperm.xlu0 %1056, %v915
      %v1058 = vpop.permute.xlu0 %1057
      %1061 = vset.pattern.permute.xlu0 0
      %1062 = vperm.xlu0 %1061, %v916
      %v1063 = vpop.permute.xlu0 %1062
      %1066 = vset.pattern.permute.xlu0 0
      %1067 = vperm.xlu0 %1066, %v917
      %v1068 = vpop.permute.xlu0 %1067
      %1071 = vset.pattern.permute.xlu0 0
      %1072 = vperm.xlu0 %1071, %v918
      %v1073 = vpop.permute.xlu0 %1072
      %1076 = vset.pattern.permute.xlu0 0
      %1077 = vperm.xlu0 %1076, %v919
      %v1078 = vpop.permute.xlu0 %1077
      %1081 = vset.pattern.permute.xlu0 0
      %1082 = vperm.xlu0 %1081, %v920
      %v1083 = vpop.permute.xlu0 %1082
      %1086 = vset.pattern.permute.xlu0 0
      %1087 = vperm.xlu0 %1086, %v921
      %v1088 = vpop.permute.xlu0 %1087
      %1091 = vset.pattern.permute.xlu0 0
      %1092 = vperm.xlu0 %1091, %v922
      %v1093 = vpop.permute.xlu0 %1092
      %1096 = vset.pattern.permute.xlu0 0
      %1097 = vperm.xlu0 %1096, %v923
      %v1098 = vpop.permute.xlu0 %1097
      %1101 = vset.pattern.permute.xlu0 0
      %1102 = vperm.xlu0 %1101, %v924
      %v1103 = vpop.permute.xlu0 %1102
      %1106 = vset.pattern.permute.xlu0 0
      %1107 = vperm.xlu0 %1106, %v925
      %v1108 = vpop.permute.xlu0 %1107
      %1111 = vset.pattern.permute.xlu0 0
      %1112 = vperm.xlu0 %1111, %v926
      %v1113 = vpop.permute.xlu0 %1112
      %1116 = vset.pattern.permute.xlu0 0
      %1117 = vperm.xlu0 %1116, %v927
      %v1118 = vpop.permute.xlu0 %1117
      %1121 = vset.pattern.permute.xlu0 0
      %1122 = vperm.xlu0 %1121, %v928
      %v1123 = vpop.permute.xlu0 %1122
      %1126 = vset.pattern.permute.xlu0 0
      %1127 = vperm.xlu0 %1126, %v929
      %v1128 = vpop.permute.xlu0 %1127
      %1131 = vset.pattern.permute.xlu0 0
      %1132 = vperm.xlu0 %1131, %v930
      %v1133 = vpop.permute.xlu0 %1132
      %1136 = vset.pattern.permute.xlu0 0
      %1137 = vperm.xlu0 %1136, %v931
      %v1138 = vpop.permute.xlu0 %1137
      %1141 = vset.pattern.permute.xlu0 0
      %1142 = vperm.xlu0 %1141, %v932
      %v1143 = vpop.permute.xlu0 %1142
      %1146 = vset.pattern.permute.xlu0 0
      %1147 = vperm.xlu0 %1146, %v933
      %v1148 = vpop.permute.xlu0 %1147
      %1151 = vset.pattern.permute.xlu0 0
      %1152 = vperm.xlu0 %1151, %v934
      %v1153 = vpop.permute.xlu0 %1152
      %1156 = vset.pattern.permute.xlu0 0
      %1157 = vperm.xlu0 %1156, %v935
      %v1158 = vpop.permute.xlu0 %1157
      %1161 = vset.pattern.permute.xlu0 0
      %1162 = vperm.xlu0 %1161, %v936
      %v1163 = vpop.permute.xlu0 %1162
      %1166 = vset.pattern.permute.xlu0 0
      %1167 = vperm.xlu0 %1166, %v937
      %v1168 = vpop.permute.xlu0 %1167
      %1171 = vset.pattern.permute.xlu0 0
      %1172 = vperm.xlu0 %1171, %v938
      %v1173 = vpop.permute.xlu0 %1172
      %1176 = vset.pattern.permute.xlu0 0
      %1177 = vperm.xlu0 %1176, %v939
      %v1178 = vpop.permute.xlu0 %1177
      %v1180 = vmul.f32 %v844, %v943
      %v1181 = vmul.f32 %v845, %v948
      %v1182 = vmul.f32 %v846, %v953
      %v1183 = vmul.f32 %v847, %v958
      %v1184 = vmul.f32 %v848, %v963
      %v1185 = vmul.f32 %v849, %v968
      %v1186 = vmul.f32 %v850, %v973
      %v1187 = vmul.f32 %v851, %v978
      %v1188 = vmul.f32 %v852, %v983
      %v1189 = vmul.f32 %v853, %v988
      %v1190 = vmul.f32 %v854, %v993
      %v1191 = vmul.f32 %v855, %v998
      %v1192 = vmul.f32 %v856, %v1003
      %v1193 = vmul.f32 %v857, %v1008
      %v1194 = vmul.f32 %v858, %v1013
      %v1195 = vmul.f32 %v859, %v1018
      %v1196 = vmul.f32 %v860, %v1023
      %v1197 = vmul.f32 %v861, %v1028
      %v1198 = vmul.f32 %v862, %v1033
      %v1199 = vmul.f32 %v863, %v1038
      %v1200 = vmul.f32 %v864, %v1043
      %v1201 = vmul.f32 %v865, %v1048
      %v1202 = vmul.f32 %v866, %v1053
      %v1203 = vmul.f32 %v867, %v1058
      %v1204 = vmul.f32 %v868, %v1063
      %v1205 = vmul.f32 %v869, %v1068
      %v1206 = vmul.f32 %v870, %v1073
      %v1207 = vmul.f32 %v871, %v1078
      %v1208 = vmul.f32 %v872, %v1083
      %v1209 = vmul.f32 %v873, %v1088
      %v1210 = vmul.f32 %v874, %v1093
      %v1211 = vmul.f32 %v875, %v1098
      %v1212 = vmul.f32 %v876, %v1103
      %v1213 = vmul.f32 %v877, %v1108
      %v1214 = vmul.f32 %v878, %v1113
      %v1215 = vmul.f32 %v879, %v1118
      %v1216 = vmul.f32 %v880, %v1123
      %v1217 = vmul.f32 %v881, %v1128
      %v1218 = vmul.f32 %v882, %v1133
      %v1219 = vmul.f32 %v883, %v1138
      %v1220 = vmul.f32 %v884, %v1143
      %v1221 = vmul.f32 %v885, %v1148
      %v1222 = vmul.f32 %v886, %v1153
      %v1223 = vmul.f32 %v887, %v1158
      %v1224 = vmul.f32 %v888, %v1163
      %v1225 = vmul.f32 %v889, %v1168
      %v1226 = vmul.f32 %v890, %v1173
      %v1227 = vmul.f32 %v891, %v1178
      %v1228 = vpack.c.bf16 %v1181, %v1180
      %v1229 = vpack.c.bf16 %v1183, %v1182
      %v1230 = vpack.c.bf16 %v1185, %v1184
      %v1231 = vpack.c.bf16 %v1187, %v1186
      %v1232 = vpack.c.bf16 %v1189, %v1188
      %v1233 = vpack.c.bf16 %v1191, %v1190
      %v1234 = vpack.c.bf16 %v1193, %v1192
      %v1235 = vpack.c.bf16 %v1195, %v1194
      %v1236 = vpack.c.bf16 %v1197, %v1196
      %v1237 = vpack.c.bf16 %v1199, %v1198
      %v1238 = vpack.c.bf16 %v1201, %v1200
      %v1239 = vpack.c.bf16 %v1203, %v1202
      %v1240 = vpack.c.bf16 %v1205, %v1204
      %v1241 = vpack.c.bf16 %v1207, %v1206
      %v1242 = vpack.c.bf16 %v1209, %v1208
      %v1243 = vpack.c.bf16 %v1211, %v1210
      %v1244 = vpack.c.bf16 %v1213, %v1212
      %v1245 = vpack.c.bf16 %v1215, %v1214
      %v1246 = vpack.c.bf16 %v1217, %v1216
      %v1247 = vpack.c.bf16 %v1219, %v1218
      %v1248 = vpack.c.bf16 %v1221, %v1220
      %v1249 = vpack.c.bf16 %v1223, %v1222
      %v1250 = vpack.c.bf16 %v1225, %v1224
      %v1251 = vpack.c.bf16 %v1227, %v1226
      %v1276 = vunpack.c.l.b16 %v1228
      %v1277 = vunpack.c.h.b16 %v1228
      %v1278 = vunpack.c.l.b16 %v1229
      %v1279 = vunpack.c.h.b16 %v1229
      %v1280 = vunpack.c.l.b16 %v1230
      %v1281 = vunpack.c.h.b16 %v1230
      %v1282 = vunpack.c.l.b16 %v1231
      %v1283 = vunpack.c.h.b16 %v1231
      %v1284 = vunpack.c.l.b16 %v1232
      %v1285 = vunpack.c.h.b16 %v1232
      %v1286 = vunpack.c.l.b16 %v1233
      %v1287 = vunpack.c.h.b16 %v1233
      %v1288 = vunpack.c.l.b16 %v1234
      %v1289 = vunpack.c.h.b16 %v1234
      %v1290 = vunpack.c.l.b16 %v1235
      %v1291 = vunpack.c.h.b16 %v1235
      %v1292 = vunpack.c.l.b16 %v1236
      %v1293 = vunpack.c.h.b16 %v1236
      %v1294 = vunpack.c.l.b16 %v1237
      %v1295 = vunpack.c.h.b16 %v1237
      %v1296 = vunpack.c.l.b16 %v1238
      %v1297 = vunpack.c.h.b16 %v1238
      %v1298 = vunpack.c.l.b16 %v1239
      %v1299 = vunpack.c.h.b16 %v1239
      %v1300 = vunpack.c.l.b16 %v1240
      %v1301 = vunpack.c.h.b16 %v1240
      %v1302 = vunpack.c.l.b16 %v1241
      %v1303 = vunpack.c.h.b16 %v1241
      %v1304 = vunpack.c.l.b16 %v1242
      %v1305 = vunpack.c.h.b16 %v1242
      %v1306 = vunpack.c.l.b16 %v1243
      %v1307 = vunpack.c.h.b16 %v1243
      %v1308 = vunpack.c.l.b16 %v1244
      %v1309 = vunpack.c.h.b16 %v1244
      %v1310 = vunpack.c.l.b16 %v1245
      %v1311 = vunpack.c.h.b16 %v1245
      %v1312 = vunpack.c.l.b16 %v1246
      %v1313 = vunpack.c.h.b16 %v1246
      %v1314 = vunpack.c.l.b16 %v1247
      %v1315 = vunpack.c.h.b16 %v1247
      %v1316 = vunpack.c.l.b16 %v1248
      %v1317 = vunpack.c.h.b16 %v1248
      %v1318 = vunpack.c.l.b16 %v1249
      %v1319 = vunpack.c.h.b16 %v1249
      %v1320 = vunpack.c.l.b16 %v1250
      %v1321 = vunpack.c.h.b16 %v1250
      %v1322 = vunpack.c.l.b16 %v1251
      %v1323 = vunpack.c.h.b16 %v1251
      %v1324 = vpack.c.b16 %v1276, %v1276
      %v1325 = vpack.c.b16 %v1277, %v1277
      %v1326 = vpack.c.b16 %v1278, %v1278
      %v1327 = vpack.c.b16 %v1279, %v1279
      %v1328 = vpack.c.b16 %v1280, %v1280
      %v1329 = vpack.c.b16 %v1281, %v1281
      %v1330 = vpack.c.b16 %v1282, %v1282
      %v1331 = vpack.c.b16 %v1283, %v1283
      %v1332 = vpack.c.b16 %v1284, %v1284
      %v1333 = vpack.c.b16 %v1285, %v1285
      %v1334 = vpack.c.b16 %v1286, %v1286
      %v1335 = vpack.c.b16 %v1287, %v1287
      %v1336 = vpack.c.b16 %v1288, %v1288
      %v1337 = vpack.c.b16 %v1289, %v1289
      %v1338 = vpack.c.b16 %v1290, %v1290
      %v1339 = vpack.c.b16 %v1291, %v1291
      %v1340 = vpack.c.b16 %v1292, %v1292
      %v1341 = vpack.c.b16 %v1293, %v1293
      %v1342 = vpack.c.b16 %v1294, %v1294
      %v1343 = vpack.c.b16 %v1295, %v1295
      %v1344 = vpack.c.b16 %v1296, %v1296
      %v1345 = vpack.c.b16 %v1297, %v1297
      %v1346 = vpack.c.b16 %v1298, %v1298
      %v1347 = vpack.c.b16 %v1299, %v1299
      %v1348 = vpack.c.b16 %v1300, %v1300
      %v1349 = vpack.c.b16 %v1301, %v1301
      %v1350 = vpack.c.b16 %v1302, %v1302
      %v1351 = vpack.c.b16 %v1303, %v1303
      %v1352 = vpack.c.b16 %v1304, %v1304
      %v1353 = vpack.c.b16 %v1305, %v1305
      %v1354 = vpack.c.b16 %v1306, %v1306
      %v1355 = vpack.c.b16 %v1307, %v1307
      %v1356 = vpack.c.b16 %v1308, %v1308
      %v1357 = vpack.c.b16 %v1309, %v1309
      %v1358 = vpack.c.b16 %v1310, %v1310
      %v1359 = vpack.c.b16 %v1311, %v1311
      %v1360 = vpack.c.b16 %v1312, %v1312
      %v1361 = vpack.c.b16 %v1313, %v1313
      %v1362 = vpack.c.b16 %v1314, %v1314
      %v1363 = vpack.c.b16 %v1315, %v1315
      %v1364 = vpack.c.b16 %v1316, %v1316
      %v1365 = vpack.c.b16 %v1317, %v1317
      %v1366 = vpack.c.b16 %v1318, %v1318
      %v1367 = vpack.c.b16 %v1319, %v1319
      %v1368 = vpack.c.b16 %v1320, %v1320
      %v1369 = vpack.c.b16 %v1321, %v1321
      %v1370 = vpack.c.b16 %v1322, %v1322
      %v1371 = vpack.c.b16 %v1323, %v1323
      %1420 = vst [vmem:[%s301] sm:$0xf] %v1324
      %1421 = vst [vmem:[%s301 + $0x4] sm:$0xf] %v1325
      %1422 = vst [vmem:[%s301 + $0x8] sm:$0xf] %v1326
      %1423 = vst [vmem:[%s301 + $0xc] sm:$0xf] %v1327
      %1424 = vst [vmem:[%s301 + $0x10] sm:$0xf] %v1328
      %1425 = vst [vmem:[%s301 + $0x14] sm:$0xf] %v1329
      %1426 = vst [vmem:[%s301 + $0x18] sm:$0xf] %v1330
      %1427 = vst [vmem:[%s301 + $0x1c] sm:$0xf] %v1331
      %1428 = vst [vmem:[%s301 + $0x20] sm:$0xf] %v1332
      %1429 = vst [vmem:[%s301 + $0x24] sm:$0xf] %v1333
      %1430 = vst [vmem:[%s301 + $0x28] sm:$0xf] %v1334
      %1431 = vst [vmem:[%s301 + $0x2c] sm:$0xf] %v1335
      %1432 = vst [vmem:[%s301 + $0x30] sm:$0xf] %v1336
      %1433 = vst [vmem:[%s301 + $0x34] sm:$0xf] %v1337
      %1434 = vst [vmem:[%s301 + $0x38] sm:$0xf] %v1338
      %1435 = vst [vmem:[%s301 + $0x3c] sm:$0xf] %v1339
      %1436 = vst [vmem:[%s301 + $0x40] sm:$0xf] %v1340
      %1437 = vst [vmem:[%s301 + $0x44] sm:$0xf] %v1341
      %1438 = vst [vmem:[%s301 + $0x48] sm:$0xf] %v1342
      %1439 = vst [vmem:[%s301 + $0x4c] sm:$0xf] %v1343
      %1440 = vst [vmem:[%s301 + $0x50] sm:$0xf] %v1344
      %1441 = vst [vmem:[%s301 + $0x54] sm:$0xf] %v1345
      %1442 = vst [vmem:[%s301 + $0x58] sm:$0xf] %v1346
      %1443 = vst [vmem:[%s301 + $0x5c] sm:$0xf] %v1347
      %1444 = vst [vmem:[%s301 + $0x60] sm:$0xf] %v1348
      %1445 = vst [vmem:[%s301 + $0x64] sm:$0xf] %v1349
      %1446 = vst [vmem:[%s301 + $0x68] sm:$0xf] %v1350
      %1447 = vst [vmem:[%s301 + $0x6c] sm:$0xf] %v1351
      %1448 = vst [vmem:[%s301 + $0x70] sm:$0xf] %v1352
      %1449 = vst [vmem:[%s301 + $0x74] sm:$0xf] %v1353
      %1450 = vst [vmem:[%s301 + $0x78] sm:$0xf] %v1354
      %1451 = vst [vmem:[%s301 + $0x7c] sm:$0xf] %v1355
      %1452 = vst [vmem:[%s301 + $0x80] sm:$0xf] %v1356
      %1453 = vst [vmem:[%s301 + $0x84] sm:$0xf] %v1357
      %1454 = vst [vmem:[%s301 + $0x88] sm:$0xf] %v1358
      %1455 = vst [vmem:[%s301 + $0x8c] sm:$0xf] %v1359
      %1456 = vst [vmem:[%s301 + $0x90] sm:$0xf] %v1360
      %1457 = vst [vmem:[%s301 + $0x94] sm:$0xf] %v1361
      %1458 = vst [vmem:[%s301 + $0x98] sm:$0xf] %v1362
      %1459 = vst [vmem:[%s301 + $0x9c] sm:$0xf] %v1363
      %1460 = vst [vmem:[%s301 + $0xa0] sm:$0xf] %v1364
      %1461 = vst [vmem:[%s301 + $0xa4] sm:$0xf] %v1365
      %1462 = vst [vmem:[%s301 + $0xa8] sm:$0xf] %v1366
      %1463 = vst [vmem:[%s301 + $0xac] sm:$0xf] %v1367
      %1464 = vst [vmem:[%s301 + $0xb0] sm:$0xf] %v1368
      %1465 = vst [vmem:[%s301 + $0xb4] sm:$0xf] %v1369
      %1466 = vst [vmem:[%s301 + $0xb8] sm:$0xf] %v1370
      %1467 = vst [vmem:[%s301 + $0xbc] sm:$0xf] %v1371
      %v1468 = vadd.f32 %v1180, %v1181
      %v1469 = vadd.f32 %v1468, %v1182
      %v1470 = vadd.f32 %v1469, %v1183
      %v1471 = vadd.f32 %v1470, %v1184
      %v1472 = vadd.f32 %v1471, %v1185
      %v1473 = vadd.f32 %v1472, %v1186
      %v1474 = vadd.f32 %v1473, %v1187
      %v1475 = vadd.f32 %v1474, %v1188
      %v1476 = vadd.f32 %v1475, %v1189
      %v1477 = vadd.f32 %v1476, %v1190
      %v1478 = vadd.f32 %v1477, %v1191
      %v1479 = vadd.f32 %v1478, %v1192
      %v1480 = vadd.f32 %v1479, %v1193
      %v1481 = vadd.f32 %v1480, %v1194
      %v1482 = vadd.f32 %v1481, %v1195
      %v1483 = vadd.f32 %v1482, %v1196
      %v1484 = vadd.f32 %v1483, %v1197
      %v1485 = vadd.f32 %v1484, %v1198
      %v1486 = vadd.f32 %v1485, %v1199
      %v1487 = vadd.f32 %v1486, %v1200
      %v1488 = vadd.f32 %v1487, %v1201
      %v1489 = vadd.f32 %v1488, %v1202
      %v1490 = vadd.f32 %v1489, %v1203
      %v1491 = vadd.f32 %v1490, %v1204
      %v1492 = vadd.f32 %v1491, %v1205
      %v1493 = vadd.f32 %v1492, %v1206
      %v1494 = vadd.f32 %v1493, %v1207
      %v1495 = vadd.f32 %v1494, %v1208
      %v1496 = vadd.f32 %v1495, %v1209
      %v1497 = vadd.f32 %v1496, %v1210
      %v1498 = vadd.f32 %v1497, %v1211
      %v1499 = vadd.f32 %v1498, %v1212
      %v1500 = vadd.f32 %v1499, %v1213
      %v1501 = vadd.f32 %v1500, %v1214
      %v1502 = vadd.f32 %v1501, %v1215
      %v1503 = vadd.f32 %v1502, %v1216
      %v1504 = vadd.f32 %v1503, %v1217
      %v1505 = vadd.f32 %v1504, %v1218
      %v1506 = vadd.f32 %v1505, %v1219
      %v1507 = vadd.f32 %v1506, %v1220
      %v1508 = vadd.f32 %v1507, %v1221
      %v1509 = vadd.f32 %v1508, %v1222
      %v1510 = vadd.f32 %v1509, %v1223
      %v1511 = vadd.f32 %v1510, %v1224
      %v1512 = vadd.f32 %v1511, %v1225
      %v1513 = vadd.f32 %v1512, %v1226
      %v1514 = vadd.f32 %v1513, %v1227
      %v1515 = vrot.slane %v1514, 4
      %v1516 = vadd.f32 %v1514, %v1515
      %v1517 = vrot.slane %v1516, 2
      %v1518 = vadd.f32 %v1516, %v1517
      %v1519 = vrot.slane %v1518, 1
      %v1520 = vadd.f32 %v1518, %v1519
      %1521 = vst [vmem:[%s307] sm:$0x1] %v1520
      %v1522 = vmul.f32 %v1180, %v1180
      %v1523 = vmul.f32 %v1181, %v1181
      %v1524 = vmul.f32 %v1182, %v1182
      %v1525 = vmul.f32 %v1183, %v1183
      %v1526 = vmul.f32 %v1184, %v1184
      %v1527 = vmul.f32 %v1185, %v1185
      %v1528 = vmul.f32 %v1186, %v1186
      %v1529 = vmul.f32 %v1187, %v1187
      %v1530 = vmul.f32 %v1188, %v1188
      %v1531 = vmul.f32 %v1189, %v1189
      %v1532 = vmul.f32 %v1190, %v1190
      %v1533 = vmul.f32 %v1191, %v1191
      %v1534 = vmul.f32 %v1192, %v1192
      %v1535 = vmul.f32 %v1193, %v1193
      %v1536 = vmul.f32 %v1194, %v1194
      %v1537 = vmul.f32 %v1195, %v1195
      %v1538 = vmul.f32 %v1196, %v1196
      %v1539 = vmul.f32 %v1197, %v1197
      %v1540 = vmul.f32 %v1198, %v1198
      %v1541 = vmul.f32 %v1199, %v1199
      %v1542 = vmul.f32 %v1200, %v1200
      %v1543 = vmul.f32 %v1201, %v1201
      %v1544 = vmul.f32 %v1202, %v1202
      %v1545 = vmul.f32 %v1203, %v1203
      %v1546 = vmul.f32 %v1204, %v1204
      %v1547 = vmul.f32 %v1205, %v1205
      %v1548 = vmul.f32 %v1206, %v1206
      %v1549 = vmul.f32 %v1207, %v1207
      %v1550 = vmul.f32 %v1208, %v1208
      %v1551 = vmul.f32 %v1209, %v1209
      %v1552 = vmul.f32 %v1210, %v1210
      %v1553 = vmul.f32 %v1211, %v1211
      %v1554 = vmul.f32 %v1212, %v1212
      %v1555 = vmul.f32 %v1213, %v1213
      %v1556 = vmul.f32 %v1214, %v1214
      %v1557 = vmul.f32 %v1215, %v1215
      %v1558 = vmul.f32 %v1216, %v1216
      %v1559 = vmul.f32 %v1217, %v1217
      %v1560 = vmul.f32 %v1218, %v1218
      %v1561 = vmul.f32 %v1219, %v1219
      %v1562 = vmul.f32 %v1220, %v1220
      %v1563 = vmul.f32 %v1221, %v1221
      %v1564 = vmul.f32 %v1222, %v1222
      %v1565 = vmul.f32 %v1223, %v1223
      %v1566 = vmul.f32 %v1224, %v1224
      %v1567 = vmul.f32 %v1225, %v1225
      %v1568 = vmul.f32 %v1226, %v1226
      %v1569 = vmul.f32 %v1227, %v1227
      %v1570 = vadd.f32 %v1522, %v1523
      %v1571 = vadd.f32 %v1570, %v1524
      %v1572 = vadd.f32 %v1571, %v1525
      %v1573 = vadd.f32 %v1572, %v1526
      %v1574 = vadd.f32 %v1573, %v1527
      %v1575 = vadd.f32 %v1574, %v1528
      %v1576 = vadd.f32 %v1575, %v1529
      %v1577 = vadd.f32 %v1576, %v1530
      %v1578 = vadd.f32 %v1577, %v1531
      %v1579 = vadd.f32 %v1578, %v1532
      %v1580 = vadd.f32 %v1579, %v1533
      %v1581 = vadd.f32 %v1580, %v1534
      %v1582 = vadd.f32 %v1581, %v1535
      %v1583 = vadd.f32 %v1582, %v1536
      %v1584 = vadd.f32 %v1583, %v1537
      %v1585 = vadd.f32 %v1584, %v1538
      %v1586 = vadd.f32 %v1585, %v1539
      %v1587 = vadd.f32 %v1586, %v1540
      %v1588 = vadd.f32 %v1587, %v1541
      %v1589 = vadd.f32 %v1588, %v1542
      %v1590 = vadd.f32 %v1589, %v1543
      %v1591 = vadd.f32 %v1590, %v1544
      %v1592 = vadd.f32 %v1591, %v1545
      %v1593 = vadd.f32 %v1592, %v1546
      %v1594 = vadd.f32 %v1593, %v1547
      %v1595 = vadd.f32 %v1594, %v1548
      %v1596 = vadd.f32 %v1595, %v1549
      %v1597 = vadd.f32 %v1596, %v1550
      %v1598 = vadd.f32 %v1597, %v1551
      %v1599 = vadd.f32 %v1598, %v1552
      %v1600 = vadd.f32 %v1599, %v1553
      %v1601 = vadd.f32 %v1600, %v1554
      %v1602 = vadd.f32 %v1601, %v1555
      %v1603 = vadd.f32 %v1602, %v1556
      %v1604 = vadd.f32 %v1603, %v1557
      %v1605 = vadd.f32 %v1604, %v1558
      %v1606 = vadd.f32 %v1605, %v1559
      %v1607 = vadd.f32 %v1606, %v1560
      %v1608 = vadd.f32 %v1607, %v1561
      %v1609 = vadd.f32 %v1608, %v1562
      %v1610 = vadd.f32 %v1609, %v1563
      %v1611 = vadd.f32 %v1610, %v1564
      %v1612 = vadd.f32 %v1611, %v1565
      %v1613 = vadd.f32 %v1612, %v1566
      %v1614 = vadd.f32 %v1613, %v1567
      %v1615 = vadd.f32 %v1614, %v1568
      %v1616 = vadd.f32 %v1615, %v1569
      %v1617 = vrot.slane %v1616, 4
      %v1618 = vadd.f32 %v1616, %v1617
      %v1619 = vrot.slane %v1618, 2
      %v1620 = vadd.f32 %v1618, %v1619
      %v1621 = vrot.slane %v1620, 1
      %v1622 = vadd.f32 %v1620, %v1621
      %1623 = vst [vmem:[%s313] sm:$0x1] %v1622
      %p1624 = scmp.lt.s32.totalorder %s21, 1
      %s1625 = scalar_select %p1624, %s21, 1
      %p1626 = scmp.lt.s32.totalorder %s22, 0
      %s1627 = scalar_select %p1626, %s22, 0
      %s1628 = smul.addr %s1627, 48
      %s1629 = smul.addr %s1625, 48
      %s1630 = sadd.s32 %s1628, %s1629
      %s1631 = smul.addr %s1630, 4
      %s1632 = scalar_lea.vmem %s3, %s1631
      %p1633 = scmp.lt.s32.totalorder %s21, 1
      %s1634 = scalar_select %p1633, %s21, 1
      %p1635 = scmp.lt.s32.totalorder %s22, 0
      %s1636 = scalar_select %p1635, %s22, 0
      %s1637 = sadd.s32 %s1636, %s1634
      %s1638 = scalar_lea.vmem %s4, %s1637
      %p1639 = scmp.lt.s32.totalorder %s21, 1
      %s1640 = scalar_select %p1639, %s21, 1
      %p1641 = scmp.lt.s32.totalorder %s22, 0
      %s1642 = scalar_select %p1641, %s22, 0
      %s1643 = sadd.s32 %s1642, %s1640
      %s1644 = scalar_lea.vmem %s5, %s1643
      // Predicated region
      $region33: #{conv_block_forward.2} parent=31 // pred_check
        %p1645 = pneg %p124
      $region34: #{conv_block_forward.2} parent=31 // pred_check_branch
        %1647 = sbr.rel (%p1645) target = $region36
      $region35: #{conv_block_forward.2} parent=31 // pred_region
        _
      $region36: #{conv_block_forward.2} parent=31 // pred_fallthru
        _
      // Predicated region
      $region37: #{conv_block_forward.2} parent=31 // pred_check
        %p1648 = pneg %p152
      $region38: #{conv_block_forward.2} parent=31 // pred_check_branch
        %1650 = sbr.rel (%p1648) target = $region40
      $region39: #{conv_block_forward.2} parent=31 // pred_region
        _
      $region40: #{conv_block_forward.2} parent=31 // pred_fallthru
        _
      // Predicated region
      $region41: #{conv_block_forward.2} parent=31 // pred_check
        %p1651 = pneg %p180
      $region42: #{conv_block_forward.2} parent=31 // pred_check_branch
        %1653 = sbr.rel (%p1651) target = $region44
      $region43: #{conv_block_forward.2} parent=31 // pred_region
        _
      $region44: #{conv_block_forward.2} parent=31 // pred_fallthru
        _
    $region32: #{conv_block_forward.2} parent=5 // pred_fallthru
      _
    %p1654 = scmp.le.s32.totalorder 2, %s12
    // Predicated region
    $region45: #{conv_block_forward.2} parent=5 // pred_check
      %p1655 = pneg %p1654
    $region46: #{conv_block_forward.2} parent=5 // pred_check_branch
      %1657 = sbr.rel (%p1655) target = $region48
    $region47: #{conv_block_forward.2} parent=5 // pred_region
      %s1658 = ssub.s32 %s12, 2
      // Predicated region
      $region49: #{conv_block_forward.2} parent=47 // pred_check
        %p1659 = pneg %p130
      $region50: #{conv_block_forward.2} parent=47 // pred_check_branch
        %1661 = sbr.rel (%p1659) target = $region52
      $region51: #{conv_block_forward.2} parent=47 // pred_region
        %p1662 = scmp.lt.s32.totalorder %s23, 1
        %s1663 = scalar_select %p1662, %s23, 1
        %p1664 = scmp.lt.s32.totalorder %s24, 0
        %s1665 = scalar_select %p1664, %s24, 0
        %s1666 = smul.addr %s1665, 48
        %s1667 = smul.addr %s1663, 48
        %s1668 = sadd.s32 %s1666, %s1667
        %s1669 = smul.addr %s1668, 4
        %s1670 = scalar_lea.vmem %s3, %s1669
      $region52: #{conv_block_forward.2} parent=47 // pred_fallthru
        _
      // Predicated region
      $region53: #{conv_block_forward.2} parent=47 // pred_check
        %p1671 = pneg %p158
      $region54: #{conv_block_forward.2} parent=47 // pred_check_branch
        %1673 = sbr.rel (%p1671) target = $region56
      $region55: #{conv_block_forward.2} parent=47 // pred_region
        %p1674 = scmp.lt.s32.totalorder %s23, 1
        %s1675 = scalar_select %p1674, %s23, 1
        %p1676 = scmp.lt.s32.totalorder %s24, 0
        %s1677 = scalar_select %p1676, %s24, 0
        %s1678 = sadd.s32 %s1677, %s1675
        %s1679 = scalar_lea.vmem %s4, %s1678
      $region56: #{conv_block_forward.2} parent=47 // pred_fallthru
        _
      // Predicated region
      $region57: #{conv_block_forward.2} parent=47 // pred_check
        %p1680 = pneg %p186
      $region58: #{conv_block_forward.2} parent=47 // pred_check_branch
        %1682 = sbr.rel (%p1680) target = $region60
      $region59: #{conv_block_forward.2} parent=47 // pred_region
        %p1683 = scmp.lt.s32.totalorder %s23, 1
        %s1684 = scalar_select %p1683, %s23, 1
        %p1685 = scmp.lt.s32.totalorder %s24, 0
        %s1686 = scalar_select %p1685, %s24, 0
        %s1687 = sadd.s32 %s1686, %s1684
        %s1688 = scalar_lea.vmem %s5, %s1687
      $region60: #{conv_block_forward.2} parent=47 // pred_fallthru
        _
    $region48: #{conv_block_forward.2} parent=5 // pred_fallthru
      _
  $region6: #{conv_block_forward.2} parent=0 // loop_footer
    %s16 = sadd.s32 1, %s12
  $region7: #{conv_block_forward.2} parent=0 // loop_footer_branch
    %11 = sbr.rel target = $region3
  $region8: #{conv_block_forward.2} parent=0 // loop_exit
    _

</llo_original>
